<compile_context>
chip_gen: v7x
topology: tpu7x:2x2x1
jax: 0.10.0
libtpu: 0.0.40
codegen_flags: <defaults>
</compile_context>

<pallas_src>
import functools

import jax
import jax.numpy as jnp
from jax.experimental import pallas as pl
from jax.experimental.pallas import tpu as pltpu


def _lstm_mlp_kernel(num_layers, hidden_dim, seq_len, batch,
                     x_ref, xs_ref, h0_ref, c0_ref, *refs):
    """Fused multi-layer LSTM (wavefront-interleaved) + FC head.

    refs = wih0_t, whh0_t, b0,
           [wfused_t_l, b_l  for l in 1..num_layers-1],
           fc1_wt_h, fc1_wt_s, fc1_b, fc2_wt, fc2_b,
           out_ref

    Weight prep (wrapper): gate order permuted (i,f,g,o)->(i,f,o,g) and the
    sigmoid-gate rows pre-scaled by 0.5, so sigmoid(pre) = 0.5*(tanh(gate)+1)
    and one tanh over all 4*H lanes covers every gate.
    """
    H, L, B = hidden_dim, seq_len, batch
    wih0_ref, whh0_ref, b0_ref = refs[0], refs[1], refs[2]
    fused_refs = refs[3:3 + 2 * (num_layers - 1)]
    (fc1h_ref, fc1s_ref, fc1b_ref,
     fc2w_ref, fc2b_ref, out_ref) = refs[3 + 2 * (num_layers - 1):]

    # ---- hoisted, recurrence-independent work (schedules under the chain) ----
    # Static-feature part of fc1: zero dependence on the LSTM.
    static_part = (jnp.dot(xs_ref[...], fc1s_ref[...],
                           preferred_element_type=jnp.float32)
                   + fc1b_ref[...])                                    # (B, H) f32
    # Layer-0 input projection for ALL timesteps: one big MXU matmul.
    gates0 = (jnp.dot(x_ref[...], wih0_ref[...],
                      preferred_element_type=jnp.float32)
              + b0_ref[...])                                           # (L*B, 4H) f32

    whh0 = whh0_ref[...]                                               # (H, 4H) bf16
    wfused = [fused_refs[2 * i][...] for i in range(num_layers - 1)]   # (2H, 4H) bf16
    bfused = [fused_refs[2 * i + 1][...] for i in range(num_layers - 1)]  # (1, 4H) f32

    # ---- per-layer recurrent state, kept in vregs (h/c stay f32 for VPU math) ----
    h = [h0_ref[l] for l in range(num_layers)]
    c = [c0_ref[l] for l in range(num_layers)]
    h_bf = [h[l].astype(jnp.bfloat16) for l in range(num_layers)]
    below = [None] * num_layers   # below[l]: layer l-1's h at the step layer l runs next

    def cell(layer, gates):
        act = jnp.tanh(gates)                       # one EUP op covers all 4 gates
        s = 0.5 * (act + 1.0)                       # sigmoid affine, full 4H width
        i_s = s[:, 0 * H:1 * H]
        f_s = s[:, 1 * H:2 * H]
        o_s = s[:, 2 * H:3 * H]
        g = act[:, 3 * H:4 * H]
        c_new = f_s * c[layer] + i_s * g
        h_new = o_s * jnp.tanh(c_new)
        c[layer] = c_new
        h[layer] = h_new
        h_bf[layer] = h_new.astype(jnp.bfloat16)

    # Wavefront schedule, fully unrolled (L and num_layers are static & small):
    # layer l processes t = w - l in wavefront w; reversed layer order so each
    # layer consumes below[] before the layer beneath overwrites it.
    for w in range(L + num_layers - 1):
        for layer in reversed(range(num_layers)):
            t = w - layer
            if t < 0 or t >= L:
                continue
            if layer == 0:
                gates = gates0[t * B:(t + 1) * B, :] + jnp.dot(
                    h_bf[0], whh0, preferred_element_type=jnp.float32)
            else:
                # Single fused MXU push: [h_below_t ; h_this_{t-1}] @ [wih; whh].
                inp = jnp.concatenate([below[layer], h_bf[layer]], axis=1)  # (B, 2H) bf16
                gates = (jnp.dot(inp, wfused[layer - 1],
                                 preferred_element_type=jnp.float32)
                         + bfused[layer - 1])
            cell(layer, gates)
            if layer + 1 < num_layers:
                below[layer + 1] = h_bf[layer]

    # TODO(synk): inter-layer LSTM dropout (p=0.2) and self.dropout are
    # training-only; identity in eval mode.
    # cat(h_last, x_static) -> relu(fc1) -> fc2, with the concat eliminated by
    # splitting fc1 into its H-part and S-part (S-part hoisted above).
    hid = jnp.maximum(
        jnp.dot(h_bf[num_layers - 1], fc1h_ref[...],
                preferred_element_type=jnp.float32) + static_part, 0.0)     # (B, H)
    out_ref[...] = (jnp.dot(hid.astype(jnp.bfloat16), fc2w_ref[...],
                            preferred_element_type=jnp.float32)
                    + fc2b_ref[...])                                        # (B, O)


def lstm_model_forward(x_dynamic, x_static, h0, c0, params):
    """x_dynamic: (B, L, D) f32, x_static: (B, S) f32, h0/c0: (num_layers, B, H) f32."""
    B, L, D = x_dynamic.shape
    H = params["hidden_dim"]
    num_layers = params["num_layers"]
    O = params["fc2_wt"].shape[1]

    # Pad batch to a multiple of 8 (f32 sublane count); padded rows sliced off
    # at the end.  TODO(synk): measure Bp=16 so bf16 LHS fills a (16,128) tile.
    Bp = max(8, ((B + 7) // 8) * 8)
    pad = Bp - B
    xd = jnp.pad(x_dynamic.astype(jnp.float32), ((0, pad), (0, 0), (0, 0)))
    xs = jnp.pad(x_static.astype(jnp.float32), ((0, pad), (0, 0)))
    h0p = jnp.pad(h0.astype(jnp.float32), ((0, 0), (0, pad), (0, 0)))
    c0p = jnp.pad(c0.astype(jnp.float32), ((0, 0), (0, pad), (0, 0)))

    # Time-major, flattened to (L*Bp, D): layer-0 input projection becomes one
    # 2-D MXU matmul.  Matmul operands bf16, accumulation f32.
    x2 = jnp.transpose(xd, (1, 0, 2)).reshape(L * Bp, D).astype(jnp.bfloat16)
    xs_bf = xs.astype(jnp.bfloat16)

    inputs = [x2, xs_bf, h0p, c0p,
              params["wih0_t"], params["whh0_t"], params["b_0"]]
    for layer in range(1, num_layers):
        inputs += [params[f"wfused_t_{layer}"], params[f"b_{layer}"]]
    inputs += [params["fc1_wt_h"], params["fc1_wt_s"], params["fc1_b"],
               params["fc2_wt"], params["fc2_b"]]

    kernel = functools.partial(_lstm_mlp_kernel, num_layers, H, L, Bp)
    out = pl.pallas_call(
        kernel,
        out_shape=jax.ShapeDtypeStruct((Bp, O), jnp.float32),
        in_specs=[pl.BlockSpec(memory_space=pltpu.MemorySpace.VMEM) for _ in inputs],
        out_specs=pl.BlockSpec(memory_space=pltpu.MemorySpace.VMEM),
        # TODO(synk): once B grows, add a batch-parallel grid axis
        # (dimension_semantics=("parallel",)) to use v7x's second TensorCore;
        # at much larger L/B/H move x2 / gates to HBM with pl.Buffered specs
        # and set vmem_limit_bytes (v7x has only 64 MiB physical VMEM).
    )(*inputs)
    return out[:B]


def init_raw_params(key, input_dim, hidden_dim, static_features, output_dim, num_layers):
    """PyTorch-layout parameters in f32 (gate row order i, f, g, o)."""
    raw = {}
    scale = 1.0 / jnp.sqrt(hidden_dim)
    for layer in range(num_layers):
        d_in = input_dim if layer == 0 else hidden_dim
        key, k1, k2, k3, k4 = jax.random.split(key, 5)
        raw[f"w_ih_{layer}"] = jax.random.uniform(k1, (4 * hidden_dim, d_in), jnp.float32, -scale, scale)
        raw[f"w_hh_{layer}"] = jax.random.uniform(k2, (4 * hidden_dim, hidden_dim), jnp.float32, -scale, scale)
        raw[f"b_ih_{layer}"] = jax.random.uniform(k3, (4 * hidden_dim,), jnp.float32, -scale, scale)
        raw[f"b_hh_{layer}"] = jax.random.uniform(k4, (4 * hidden_dim,), jnp.float32, -scale, scale)
    key, k1, k2, k3, k4 = jax.random.split(key, 5)
    fin = hidden_dim + static_features
    s1 = 1.0 / jnp.sqrt(fin)
    raw["fc1_w"] = jax.random.uniform(k1, (hidden_dim, fin), jnp.float32, -s1, s1)
    raw["fc1_b"] = jax.random.uniform(k2, (hidden_dim,), jnp.float32, -s1, s1)
    s2 = 1.0 / jnp.sqrt(hidden_dim)
    raw["fc2_w"] = jax.random.uniform(k3, (output_dim, hidden_dim), jnp.float32, -s2, s2)
    raw["fc2_b"] = jax.random.uniform(k4, (output_dim,), jnp.float32, -s2, s2)
    return raw


def prepare_kernel_params(raw, hidden_dim, num_layers):
    """Kernel weight prep: gate reorder (i,f,g,o)->(i,f,o,g), fold the 0.5 of
    sigmoid(x)=0.5*(tanh(x/2)+1) into the sigmoid-gate rows, transpose for
    (B,F)@(F,4H) matmuls, concatenate [wih; whh] for layers >= 1, cast matmul
    operands to bf16, split fc1 into its H-part and S-part."""
    H = hidden_dim
    perm = jnp.concatenate([jnp.arange(0, 2 * H),          # i, f
                            jnp.arange(3 * H, 4 * H),      # o
                            jnp.arange(2 * H, 3 * H)])     # g
    gate_scale = jnp.concatenate([jnp.full((3 * H,), 0.5, jnp.float32),
                                  jnp.ones((H,), jnp.float32)])
    params = {"hidden_dim": H, "num_layers": num_layers}
    for layer in range(num_layers):
        w_ih = raw[f"w_ih_{layer}"][perm] * gate_scale[:, None]       # (4H, Din)
        w_hh = raw[f"w_hh_{layer}"][perm] * gate_scale[:, None]       # (4H, H)
        b = (raw[f"b_ih_{layer}"] + raw[f"b_hh_{layer}"])[perm] * gate_scale
        params[f"b_{layer}"] = b[None, :].astype(jnp.float32)         # (1, 4H)
        if layer == 0:
            params["wih0_t"] = w_ih.T.astype(jnp.bfloat16)            # (D, 4H)
            params["whh0_t"] = w_hh.T.astype(jnp.bfloat16)            # (H, 4H)
        else:
            wf = jnp.concatenate([w_ih, w_hh], axis=1)                # (4H, 2H)
            params[f"wfused_t_{layer}"] = wf.T.astype(jnp.bfloat16)   # (2H, 4H)
    fc1_wt = raw["fc1_w"].T                                           # (H+S, H)
    params["fc1_wt_h"] = fc1_wt[:H].astype(jnp.bfloat16)              # (H, H)
    params["fc1_wt_s"] = fc1_wt[H:].astype(jnp.bfloat16)              # (S, H)
    params["fc1_b"] = raw["fc1_b"][None, :].astype(jnp.float32)       # (1, H)
    params["fc2_wt"] = raw["fc2_w"].T.astype(jnp.bfloat16)            # (H, O)
    params["fc2_b"] = raw["fc2_b"][None, :].astype(jnp.float32)       # (1, O)
    return params


def reference_forward(x_dynamic, x_static, h0, c0, raw, hidden_dim, num_layers):
    """Pure-JAX f32 reference with PyTorch LSTM semantics (eval mode)."""
    H = hidden_dim
    seq = x_dynamic
    h_last = None
    for layer in range(num_layers):
        wih_t = raw[f"w_ih_{layer}"].T
        whh_t = raw[f"w_hh_{layer}"].T
        b = (raw[f"b_ih_{layer}"] + raw[f"b_hh_{layer}"])[None, :]
        h, c = h0[layer], c0[layer]
        outs = []
        for t in range(seq.shape[1]):
            gates = seq[:, t, :] @ wih_t + h @ whh_t + b
            i_g = jax.nn.sigmoid(gates[:, 0 * H:1 * H])
            f_g = jax.nn.sigmoid(gates[:, 1 * H:2 * H])
            g_g = jnp.tanh(gates[:, 2 * H:3 * H])
            o_g = jax.nn.sigmoid(gates[:, 3 * H:4 * H])
            c = f_g * c + i_g * g_g
            h = o_g * jnp.tanh(c)
            outs.append(h)
        seq = jnp.stack(outs, axis=1)
        h_last = h
    feat = jnp.concatenate([h_last, x_static], axis=1)
    hid = jnp.maximum(feat @ raw["fc1_w"].T + raw["fc1_b"][None, :], 0.0)
    return hid @ raw["fc2_w"].T + raw["fc2_b"][None, :]


if __name__ == "__main__":
    # Small shapes consistent with the module's forward:
    B, L = 2, 8                  # batch, sequence length
    input_dim = 8
    hidden_dim = 32
    static_features = 4
    output_dim = 2
    num_layers = 2

    key = jax.random.PRNGKey(0)
    key, kx, ks, kh, kc, kp = jax.random.split(key, 6)
    x_dynamic = jax.random.normal(kx, (B, L, input_dim), jnp.float32)
    x_static = jax.random.normal(ks, (B, static_features), jnp.float32)
    # forward() draws fresh h0/c0 from randn each call; drawn deterministically here.
    h0 = jax.random.normal(kh, (num_layers, B, hidden_dim), jnp.float32)
    c0 = jax.random.normal(kc, (num_layers, B, hidden_dim), jnp.float32)

    raw = init_raw_params(kp, input_dim, hidden_dim, static_features, output_dim, num_layers)
    params = prepare_kernel_params(raw, hidden_dim, num_layers)

    out = lstm_model_forward(x_dynamic, x_static, h0, c0, params)
    out = jax.block_until_ready(out)

    ref = reference_forward(x_dynamic, x_static, h0, c0, raw, hidden_dim, num_layers)
    assert out.shape == (B, output_dim)
    # bf16 matmul operands / f32 accumulation in the kernel vs pure-f32 reference.
    assert jnp.allclose(out, ref, rtol=2e-2, atol=2e-2), (out, ref)
    print("KERNEL_OK")
</pallas_src>

<mosaic_0001>
module attributes {stable_mosaic.version = 11 : i64} {
  func.func @_lstm_mlp_kernel(%arg0: memref<64x8xbf16, #tpu.memory_space<vmem>>, %arg1: memref<8x4xbf16, #tpu.memory_space<vmem>>, %arg2: memref<2x8x32xf32, #tpu.memory_space<vmem>>, %arg3: memref<2x8x32xf32, #tpu.memory_space<vmem>>, %arg4: memref<8x128xbf16, #tpu.memory_space<vmem>>, %arg5: memref<32x128xbf16, #tpu.memory_space<vmem>>, %arg6: memref<1x128xf32, #tpu.memory_space<vmem>>, %arg7: memref<64x128xbf16, #tpu.memory_space<vmem>>, %arg8: memref<1x128xf32, #tpu.memory_space<vmem>>, %arg9: memref<32x32xbf16, #tpu.memory_space<vmem>>, %arg10: memref<4x32xbf16, #tpu.memory_space<vmem>>, %arg11: memref<1x32xf32, #tpu.memory_space<vmem>>, %arg12: memref<32x2xbf16, #tpu.memory_space<vmem>>, %arg13: memref<1x2xf32, #tpu.memory_space<vmem>>, %arg14: memref<8x2xf32, #tpu.memory_space<vmem>>) attributes {dimension_semantics = [], scalar_prefetch = 0 : i64, scratch_operands = 0 : i64, tpu.core_type = #tpu.core_type<tc>} {
    %c0 = arith.constant 0 : index
    %c0_0 = arith.constant 0 : index
    %0 = vector.load %arg1[%c0, %c0_0] : memref<8x4xbf16, #tpu.memory_space<vmem>>, vector<8x4xbf16>
    %c0_1 = arith.constant 0 : index
    %c0_2 = arith.constant 0 : index
    %1 = vector.load %arg10[%c0_1, %c0_2] : memref<4x32xbf16, #tpu.memory_space<vmem>>, vector<4x32xbf16>
    %cst = arith.constant dense<0.000000e+00> : vector<8x32xf32>
    %2 = tpu.matmul %0, %1, %cst {dimension_numbers = #tpu.dot_dimension_numbers<[1], [0], [0], [1], [0, 0, 1, 1], [], []>} : vector<8x4xbf16>, vector<4x32xbf16>, vector<8x32xf32> -> vector<8x32xf32>
    %c0_3 = arith.constant 0 : index
    %c0_4 = arith.constant 0 : index
    %3 = vector.load %arg11[%c0_3, %c0_4] : memref<1x32xf32, #tpu.memory_space<vmem>>, vector<1x32xf32>
    %4 = vector.broadcast %3 : vector<1x32xf32> to vector<8x32xf32>
    %5 = arith.addf %2, %4 : vector<8x32xf32>
    %c0_5 = arith.constant 0 : index
    %c0_6 = arith.constant 0 : index
    %6 = vector.load %arg0[%c0_5, %c0_6] : memref<64x8xbf16, #tpu.memory_space<vmem>>, vector<64x8xbf16>
    %c0_7 = arith.constant 0 : index
    %c0_8 = arith.constant 0 : index
    %7 = vector.load %arg4[%c0_7, %c0_8] : memref<8x128xbf16, #tpu.memory_space<vmem>>, vector<8x128xbf16>
    %cst_9 = arith.constant dense<0.000000e+00> : vector<64x128xf32>
    %8 = tpu.matmul %6, %7, %cst_9 {dimension_numbers = #tpu.dot_dimension_numbers<[1], [0], [0], [1], [0, 0, 1, 1], [], []>} : vector<64x8xbf16>, vector<8x128xbf16>, vector<64x128xf32> -> vector<64x128xf32>
    %c0_10 = arith.constant 0 : index
    %c0_11 = arith.constant 0 : index
    %9 = vector.load %arg6[%c0_10, %c0_11] : memref<1x128xf32, #tpu.memory_space<vmem>>, vector<1x128xf32>
    %10 = vector.broadcast %9 : vector<1x128xf32> to vector<64x128xf32>
    %11 = arith.addf %8, %10 : vector<64x128xf32>
    %c0_12 = arith.constant 0 : index
    %c0_13 = arith.constant 0 : index
    %12 = vector.load %arg5[%c0_12, %c0_13] : memref<32x128xbf16, #tpu.memory_space<vmem>>, vector<32x128xbf16>
    %c0_14 = arith.constant 0 : index
    %c0_15 = arith.constant 0 : index
    %13 = vector.load %arg7[%c0_14, %c0_15] : memref<64x128xbf16, #tpu.memory_space<vmem>>, vector<64x128xbf16>
    %c0_16 = arith.constant 0 : index
    %c0_17 = arith.constant 0 : index
    %14 = vector.load %arg8[%c0_16, %c0_17] : memref<1x128xf32, #tpu.memory_space<vmem>>, vector<1x128xf32>
    %c0_18 = arith.constant 0 : index
    %c0_19 = arith.constant 0 : index
    %c0_20 = arith.constant 0 : index
    %15 = vector.load %arg2[%c0_18, %c0_19, %c0_20] : memref<2x8x32xf32, #tpu.memory_space<vmem>>, vector<1x8x32xf32>
    %16 = vector.shape_cast %15 : vector<1x8x32xf32> to vector<8x32xf32>
    %c1 = arith.constant 1 : index
    %c0_21 = arith.constant 0 : index
    %c0_22 = arith.constant 0 : index
    %17 = vector.load %arg2[%c1, %c0_21, %c0_22] : memref<2x8x32xf32, #tpu.memory_space<vmem>>, vector<1x8x32xf32>
    %18 = vector.shape_cast %17 : vector<1x8x32xf32> to vector<8x32xf32>
    %c0_23 = arith.constant 0 : index
    %c0_24 = arith.constant 0 : index
    %c0_25 = arith.constant 0 : index
    %19 = vector.load %arg3[%c0_23, %c0_24, %c0_25] : memref<2x8x32xf32, #tpu.memory_space<vmem>>, vector<1x8x32xf32>
    %20 = vector.shape_cast %19 : vector<1x8x32xf32> to vector<8x32xf32>
    %c1_26 = arith.constant 1 : index
    %c0_27 = arith.constant 0 : index
    %c0_28 = arith.constant 0 : index
    %21 = vector.load %arg3[%c1_26, %c0_27, %c0_28] : memref<2x8x32xf32, #tpu.memory_space<vmem>>, vector<1x8x32xf32>
    %22 = vector.shape_cast %21 : vector<1x8x32xf32> to vector<8x32xf32>
    %23 = arith.truncf %16 : vector<8x32xf32> to vector<8x32xbf16>
    %24 = arith.truncf %18 : vector<8x32xf32> to vector<8x32xbf16>
    %25 = vector.extract_strided_slice %11 {offsets = [0, 0], sizes = [8, 128], strides = [1, 1]} : vector<64x128xf32> to vector<8x128xf32>
    %cst_29 = arith.constant dense<0.000000e+00> : vector<8x128xf32>
    %26 = tpu.matmul %23, %12, %cst_29 {dimension_numbers = #tpu.dot_dimension_numbers<[1], [0], [0], [1], [0, 0, 1, 1], [], []>} : vector<8x32xbf16>, vector<32x128xbf16>, vector<8x128xf32> -> vector<8x128xf32>
    %27 = arith.addf %25, %26 : vector<8x128xf32>
    %28 = math.tanh %27 : vector<8x128xf32>
    %cst_30 = arith.constant 1.000000e+00 : f32
    %29 = vector.broadcast %cst_30 : f32 to vector<8x128xf32>
    %30 = arith.addf %28, %29 : vector<8x128xf32>
    %cst_31 = arith.constant 5.000000e-01 : f32
    %31 = vector.broadcast %cst_31 : f32 to vector<8x128xf32>
    %32 = arith.mulf %31, %30 : vector<8x128xf32>
    %33 = vector.extract_strided_slice %32 {offsets = [0, 0], sizes = [8, 32], strides = [1, 1]} : vector<8x128xf32> to vector<8x32xf32>
    %34 = vector.extract_strided_slice %32 {offsets = [0, 32], sizes = [8, 32], strides = [1, 1]} : vector<8x128xf32> to vector<8x32xf32>
    %35 = vector.extract_strided_slice %32 {offsets = [0, 64], sizes = [8, 32], strides = [1, 1]} : vector<8x128xf32> to vector<8x32xf32>
    %36 = vector.extract_strided_slice %28 {offsets = [0, 96], sizes = [8, 32], strides = [1, 1]} : vector<8x128xf32> to vector<8x32xf32>
    %37 = arith.mulf %34, %20 : vector<8x32xf32>
    %38 = arith.mulf %33, %36 : vector<8x32xf32>
    %39 = arith.addf %37, %38 : vector<8x32xf32>
    %40 = math.tanh %39 : vector<8x32xf32>
    %41 = arith.mulf %35, %40 : vector<8x32xf32>
    %42 = arith.truncf %41 : vector<8x32xf32> to vector<8x32xbf16>
    %43 = tpu.concatenate %42, %24 in 1 : vector<8x32xbf16>, vector<8x32xbf16> -> vector<8x64xbf16>
    %cst_32 = arith.constant dense<0.000000e+00> : vector<8x128xf32>
    %44 = tpu.matmul %43, %13, %cst_32 {dimension_numbers = #tpu.dot_dimension_numbers<[1], [0], [0], [1], [0, 0, 1, 1], [], []>} : vector<8x64xbf16>, vector<64x128xbf16>, vector<8x128xf32> -> vector<8x128xf32>
    %45 = vector.broadcast %14 : vector<1x128xf32> to vector<8x128xf32>
    %46 = arith.addf %44, %45 : vector<8x128xf32>
    %47 = math.tanh %46 : vector<8x128xf32>
    %cst_33 = arith.constant 1.000000e+00 : f32
    %48 = vector.broadcast %cst_33 : f32 to vector<8x128xf32>
    %49 = arith.addf %47, %48 : vector<8x128xf32>
    %cst_34 = arith.constant 5.000000e-01 : f32
    %50 = vector.broadcast %cst_34 : f32 to vector<8x128xf32>
    %51 = arith.mulf %50, %49 : vector<8x128xf32>
    %52 = vector.extract_strided_slice %51 {offsets = [0, 0], sizes = [8, 32], strides = [1, 1]} : vector<8x128xf32> to vector<8x32xf32>
    %53 = vector.extract_strided_slice %51 {offsets = [0, 32], sizes = [8, 32], strides = [1, 1]} : vector<8x128xf32> to vector<8x32xf32>
    %54 = vector.extract_strided_slice %51 {offsets = [0, 64], sizes = [8, 32], strides = [1, 1]} : vector<8x128xf32> to vector<8x32xf32>
    %55 = vector.extract_strided_slice %47 {offsets = [0, 96], sizes = [8, 32], strides = [1, 1]} : vector<8x128xf32> to vector<8x32xf32>
    %56 = arith.mulf %53, %22 : vector<8x32xf32>
    %57 = arith.mulf %52, %55 : vector<8x32xf32>
    %58 = arith.addf %56, %57 : vector<8x32xf32>
    %59 = math.tanh %58 : vector<8x32xf32>
    %60 = arith.mulf %54, %59 : vector<8x32xf32>
    %61 = arith.truncf %60 : vector<8x32xf32> to vector<8x32xbf16>
    %62 = vector.extract_strided_slice %11 {offsets = [8, 0], sizes = [8, 128], strides = [1, 1]} : vector<64x128xf32> to vector<8x128xf32>
    %cst_35 = arith.constant dense<0.000000e+00> : vector<8x128xf32>
    %63 = tpu.matmul %42, %12, %cst_35 {dimension_numbers = #tpu.dot_dimension_numbers<[1], [0], [0], [1], [0, 0, 1, 1], [], []>} : vector<8x32xbf16>, vector<32x128xbf16>, vector<8x128xf32> -> vector<8x128xf32>
    %64 = arith.addf %62, %63 : vector<8x128xf32>
    %65 = math.tanh %64 : vector<8x128xf32>
    %cst_36 = arith.constant 1.000000e+00 : f32
    %66 = vector.broadcast %cst_36 : f32 to vector<8x128xf32>
    %67 = arith.addf %65, %66 : vector<8x128xf32>
    %cst_37 = arith.constant 5.000000e-01 : f32
    %68 = vector.broadcast %cst_37 : f32 to vector<8x128xf32>
    %69 = arith.mulf %68, %67 : vector<8x128xf32>
    %70 = vector.extract_strided_slice %69 {offsets = [0, 0], sizes = [8, 32], strides = [1, 1]} : vector<8x128xf32> to vector<8x32xf32>
    %71 = vector.extract_strided_slice %69 {offsets = [0, 32], sizes = [8, 32], strides = [1, 1]} : vector<8x128xf32> to vector<8x32xf32>
    %72 = vector.extract_strided_slice %69 {offsets = [0, 64], sizes = [8, 32], strides = [1, 1]} : vector<8x128xf32> to vector<8x32xf32>
    %73 = vector.extract_strided_slice %65 {offsets = [0, 96], sizes = [8, 32], strides = [1, 1]} : vector<8x128xf32> to vector<8x32xf32>
    %74 = arith.mulf %71, %39 : vector<8x32xf32>
    %75 = arith.mulf %70, %73 : vector<8x32xf32>
    %76 = arith.addf %74, %75 : vector<8x32xf32>
    %77 = math.tanh %76 : vector<8x32xf32>
    %78 = arith.mulf %72, %77 : vector<8x32xf32>
    %79 = arith.truncf %78 : vector<8x32xf32> to vector<8x32xbf16>
    %80 = tpu.concatenate %79, %61 in 1 : vector<8x32xbf16>, vector<8x32xbf16> -> vector<8x64xbf16>
    %cst_38 = arith.constant dense<0.000000e+00> : vector<8x128xf32>
    %81 = tpu.matmul %80, %13, %cst_38 {dimension_numbers = #tpu.dot_dimension_numbers<[1], [0], [0], [1], [0, 0, 1, 1], [], []>} : vector<8x64xbf16>, vector<64x128xbf16>, vector<8x128xf32> -> vector<8x128xf32>
    %82 = vector.broadcast %14 : vector<1x128xf32> to vector<8x128xf32>
    %83 = arith.addf %81, %82 : vector<8x128xf32>
    %84 = math.tanh %83 : vector<8x128xf32>
    %cst_39 = arith.constant 1.000000e+00 : f32
    %85 = vector.broadcast %cst_39 : f32 to vector<8x128xf32>
    %86 = arith.addf %84, %85 : vector<8x128xf32>
    %cst_40 = arith.constant 5.000000e-01 : f32
    %87 = vector.broadcast %cst_40 : f32 to vector<8x128xf32>
    %88 = arith.mulf %87, %86 : vector<8x128xf32>
    %89 = vector.extract_strided_slice %88 {offsets = [0, 0], sizes = [8, 32], strides = [1, 1]} : vector<8x128xf32> to vector<8x32xf32>
    %90 = vector.extract_strided_slice %88 {offsets = [0, 32], sizes = [8, 32], strides = [1, 1]} : vector<8x128xf32> to vector<8x32xf32>
    %91 = vector.extract_strided_slice %88 {offsets = [0, 64], sizes = [8, 32], strides = [1, 1]} : vector<8x128xf32> to vector<8x32xf32>
    %92 = vector.extract_strided_slice %84 {offsets = [0, 96], sizes = [8, 32], strides = [1, 1]} : vector<8x128xf32> to vector<8x32xf32>
    %93 = arith.mulf %90, %58 : vector<8x32xf32>
    %94 = arith.mulf %89, %92 : vector<8x32xf32>
    %95 = arith.addf %93, %94 : vector<8x32xf32>
    %96 = math.tanh %95 : vector<8x32xf32>
    %97 = arith.mulf %91, %96 : vector<8x32xf32>
    %98 = arith.truncf %97 : vector<8x32xf32> to vector<8x32xbf16>
    %99 = vector.extract_strided_slice %11 {offsets = [16, 0], sizes = [8, 128], strides = [1, 1]} : vector<64x128xf32> to vector<8x128xf32>
    %cst_41 = arith.constant dense<0.000000e+00> : vector<8x128xf32>
    %100 = tpu.matmul %79, %12, %cst_41 {dimension_numbers = #tpu.dot_dimension_numbers<[1], [0], [0], [1], [0, 0, 1, 1], [], []>} : vector<8x32xbf16>, vector<32x128xbf16>, vector<8x128xf32> -> vector<8x128xf32>
    %101 = arith.addf %99, %100 : vector<8x128xf32>
    %102 = math.tanh %101 : vector<8x128xf32>
    %cst_42 = arith.constant 1.000000e+00 : f32
    %103 = vector.broadcast %cst_42 : f32 to vector<8x128xf32>
    %104 = arith.addf %102, %103 : vector<8x128xf32>
    %cst_43 = arith.constant 5.000000e-01 : f32
    %105 = vector.broadcast %cst_43 : f32 to vector<8x128xf32>
    %106 = arith.mulf %105, %104 : vector<8x128xf32>
    %107 = vector.extract_strided_slice %106 {offsets = [0, 0], sizes = [8, 32], strides = [1, 1]} : vector<8x128xf32> to vector<8x32xf32>
    %108 = vector.extract_strided_slice %106 {offsets = [0, 32], sizes = [8, 32], strides = [1, 1]} : vector<8x128xf32> to vector<8x32xf32>
    %109 = vector.extract_strided_slice %106 {offsets = [0, 64], sizes = [8, 32], strides = [1, 1]} : vector<8x128xf32> to vector<8x32xf32>
    %110 = vector.extract_strided_slice %102 {offsets = [0, 96], sizes = [8, 32], strides = [1, 1]} : vector<8x128xf32> to vector<8x32xf32>
    %111 = arith.mulf %108, %76 : vector<8x32xf32>
    %112 = arith.mulf %107, %110 : vector<8x32xf32>
    %113 = arith.addf %111, %112 : vector<8x32xf32>
    %114 = math.tanh %113 : vector<8x32xf32>
    %115 = arith.mulf %109, %114 : vector<8x32xf32>
    %116 = arith.truncf %115 : vector<8x32xf32> to vector<8x32xbf16>
    %117 = tpu.concatenate %116, %98 in 1 : vector<8x32xbf16>, vector<8x32xbf16> -> vector<8x64xbf16>
    %cst_44 = arith.constant dense<0.000000e+00> : vector<8x128xf32>
    %118 = tpu.matmul %117, %13, %cst_44 {dimension_numbers = #tpu.dot_dimension_numbers<[1], [0], [0], [1], [0, 0, 1, 1], [], []>} : vector<8x64xbf16>, vector<64x128xbf16>, vector<8x128xf32> -> vector<8x128xf32>
    %119 = vector.broadcast %14 : vector<1x128xf32> to vector<8x128xf32>
    %120 = arith.addf %118, %119 : vector<8x128xf32>
    %121 = math.tanh %120 : vector<8x128xf32>
    %cst_45 = arith.constant 1.000000e+00 : f32
    %122 = vector.broadcast %cst_45 : f32 to vector<8x128xf32>
    %123 = arith.addf %121, %122 : vector<8x128xf32>
    %cst_46 = arith.constant 5.000000e-01 : f32
    %124 = vector.broadcast %cst_46 : f32 to vector<8x128xf32>
    %125 = arith.mulf %124, %123 : vector<8x128xf32>
    %126 = vector.extract_strided_slice %125 {offsets = [0, 0], sizes = [8, 32], strides = [1, 1]} : vector<8x128xf32> to vector<8x32xf32>
    %127 = vector.extract_strided_slice %125 {offsets = [0, 32], sizes = [8, 32], strides = [1, 1]} : vector<8x128xf32> to vector<8x32xf32>
    %128 = vector.extract_strided_slice %125 {offsets = [0, 64], sizes = [8, 32], strides = [1, 1]} : vector<8x128xf32> to vector<8x32xf32>
    %129 = vector.extract_strided_slice %121 {offsets = [0, 96], sizes = [8, 32], strides = [1, 1]} : vector<8x128xf32> to vector<8x32xf32>
    %130 = arith.mulf %127, %95 : vector<8x32xf32>
    %131 = arith.mulf %126, %129 : vector<8x32xf32>
    %132 = arith.addf %130, %131 : vector<8x32xf32>
    %133 = math.tanh %132 : vector<8x32xf32>
    %134 = arith.mulf %128, %133 : vector<8x32xf32>
    %135 = arith.truncf %134 : vector<8x32xf32> to vector<8x32xbf16>
    %136 = vector.extract_strided_slice %11 {offsets = [24, 0], sizes = [8, 128], strides = [1, 1]} : vector<64x128xf32> to vector<8x128xf32>
    %cst_47 = arith.constant dense<0.000000e+00> : vector<8x128xf32>
    %137 = tpu.matmul %116, %12, %cst_47 {dimension_numbers = #tpu.dot_dimension_numbers<[1], [0], [0], [1], [0, 0, 1, 1], [], []>} : vector<8x32xbf16>, vector<32x128xbf16>, vector<8x128xf32> -> vector<8x128xf32>
    %138 = arith.addf %136, %137 : vector<8x128xf32>
    %139 = math.tanh %138 : vector<8x128xf32>
    %cst_48 = arith.constant 1.000000e+00 : f32
    %140 = vector.broadcast %cst_48 : f32 to vector<8x128xf32>
    %141 = arith.addf %139, %140 : vector<8x128xf32>
    %cst_49 = arith.constant 5.000000e-01 : f32
    %142 = vector.broadcast %cst_49 : f32 to vector<8x128xf32>
    %143 = arith.mulf %142, %141 : vector<8x128xf32>
    %144 = vector.extract_strided_slice %143 {offsets = [0, 0], sizes = [8, 32], strides = [1, 1]} : vector<8x128xf32> to vector<8x32xf32>
    %145 = vector.extract_strided_slice %143 {offsets = [0, 32], sizes = [8, 32], strides = [1, 1]} : vector<8x128xf32> to vector<8x32xf32>
    %146 = vector.extract_strided_slice %143 {offsets = [0, 64], sizes = [8, 32], strides = [1, 1]} : vector<8x128xf32> to vector<8x32xf32>
    %147 = vector.extract_strided_slice %139 {offsets = [0, 96], sizes = [8, 32], strides = [1, 1]} : vector<8x128xf32> to vector<8x32xf32>
    %148 = arith.mulf %145, %113 : vector<8x32xf32>
    %149 = arith.mulf %144, %147 : vector<8x32xf32>
    %150 = arith.addf %148, %149 : vector<8x32xf32>
    %151 = math.tanh %150 : vector<8x32xf32>
    %152 = arith.mulf %146, %151 : vector<8x32xf32>
    %153 = arith.truncf %152 : vector<8x32xf32> to vector<8x32xbf16>
    %154 = tpu.concatenate %153, %135 in 1 : vector<8x32xbf16>, vector<8x32xbf16> -> vector<8x64xbf16>
    %cst_50 = arith.constant dense<0.000000e+00> : vector<8x128xf32>
    %155 = tpu.matmul %154, %13, %cst_50 {dimension_numbers = #tpu.dot_dimension_numbers<[1], [0], [0], [1], [0, 0, 1, 1], [], []>} : vector<8x64xbf16>, vector<64x128xbf16>, vector<8x128xf32> -> vector<8x128xf32>
    %156 = vector.broadcast %14 : vector<1x128xf32> to vector<8x128xf32>
    %157 = arith.addf %155, %156 : vector<8x128xf32>
    %158 = math.tanh %157 : vector<8x128xf32>
    %cst_51 = arith.constant 1.000000e+00 : f32
    %159 = vector.broadcast %cst_51 : f32 to vector<8x128xf32>
    %160 = arith.addf %158, %159 : vector<8x128xf32>
    %cst_52 = arith.constant 5.000000e-01 : f32
    %161 = vector.broadcast %cst_52 : f32 to vector<8x128xf32>
    %162 = arith.mulf %161, %160 : vector<8x128xf32>
    %163 = vector.extract_strided_slice %162 {offsets = [0, 0], sizes = [8, 32], strides = [1, 1]} : vector<8x128xf32> to vector<8x32xf32>
    %164 = vector.extract_strided_slice %162 {offsets = [0, 32], sizes = [8, 32], strides = [1, 1]} : vector<8x128xf32> to vector<8x32xf32>
    %165 = vector.extract_strided_slice %162 {offsets = [0, 64], sizes = [8, 32], strides = [1, 1]} : vector<8x128xf32> to vector<8x32xf32>
    %166 = vector.extract_strided_slice %158 {offsets = [0, 96], sizes = [8, 32], strides = [1, 1]} : vector<8x128xf32> to vector<8x32xf32>
    %167 = arith.mulf %164, %132 : vector<8x32xf32>
    %168 = arith.mulf %163, %166 : vector<8x32xf32>
    %169 = arith.addf %167, %168 : vector<8x32xf32>
    %170 = math.tanh %169 : vector<8x32xf32>
    %171 = arith.mulf %165, %170 : vector<8x32xf32>
    %172 = arith.truncf %171 : vector<8x32xf32> to vector<8x32xbf16>
    %173 = vector.extract_strided_slice %11 {offsets = [32, 0], sizes = [8, 128], strides = [1, 1]} : vector<64x128xf32> to vector<8x128xf32>
    %cst_53 = arith.constant dense<0.000000e+00> : vector<8x128xf32>
    %174 = tpu.matmul %153, %12, %cst_53 {dimension_numbers = #tpu.dot_dimension_numbers<[1], [0], [0], [1], [0, 0, 1, 1], [], []>} : vector<8x32xbf16>, vector<32x128xbf16>, vector<8x128xf32> -> vector<8x128xf32>
    %175 = arith.addf %173, %174 : vector<8x128xf32>
    %176 = math.tanh %175 : vector<8x128xf32>
    %cst_54 = arith.constant 1.000000e+00 : f32
    %177 = vector.broadcast %cst_54 : f32 to vector<8x128xf32>
    %178 = arith.addf %176, %177 : vector<8x128xf32>
    %cst_55 = arith.constant 5.000000e-01 : f32
    %179 = vector.broadcast %cst_55 : f32 to vector<8x128xf32>
    %180 = arith.mulf %179, %178 : vector<8x128xf32>
    %181 = vector.extract_strided_slice %180 {offsets = [0, 0], sizes = [8, 32], strides = [1, 1]} : vector<8x128xf32> to vector<8x32xf32>
    %182 = vector.extract_strided_slice %180 {offsets = [0, 32], sizes = [8, 32], strides = [1, 1]} : vector<8x128xf32> to vector<8x32xf32>
    %183 = vector.extract_strided_slice %180 {offsets = [0, 64], sizes = [8, 32], strides = [1, 1]} : vector<8x128xf32> to vector<8x32xf32>
    %184 = vector.extract_strided_slice %176 {offsets = [0, 96], sizes = [8, 32], strides = [1, 1]} : vector<8x128xf32> to vector<8x32xf32>
    %185 = arith.mulf %182, %150 : vector<8x32xf32>
    %186 = arith.mulf %181, %184 : vector<8x32xf32>
    %187 = arith.addf %185, %186 : vector<8x32xf32>
    %188 = math.tanh %187 : vector<8x32xf32>
    %189 = arith.mulf %183, %188 : vector<8x32xf32>
    %190 = arith.truncf %189 : vector<8x32xf32> to vector<8x32xbf16>
    %191 = tpu.concatenate %190, %172 in 1 : vector<8x32xbf16>, vector<8x32xbf16> -> vector<8x64xbf16>
    %cst_56 = arith.constant dense<0.000000e+00> : vector<8x128xf32>
    %192 = tpu.matmul %191, %13, %cst_56 {dimension_numbers = #tpu.dot_dimension_numbers<[1], [0], [0], [1], [0, 0, 1, 1], [], []>} : vector<8x64xbf16>, vector<64x128xbf16>, vector<8x128xf32> -> vector<8x128xf32>
    %193 = vector.broadcast %14 : vector<1x128xf32> to vector<8x128xf32>
    %194 = arith.addf %192, %193 : vector<8x128xf32>
    %195 = math.tanh %194 : vector<8x128xf32>
    %cst_57 = arith.constant 1.000000e+00 : f32
    %196 = vector.broadcast %cst_57 : f32 to vector<8x128xf32>
    %197 = arith.addf %195, %196 : vector<8x128xf32>
    %cst_58 = arith.constant 5.000000e-01 : f32
    %198 = vector.broadcast %cst_58 : f32 to vector<8x128xf32>
    %199 = arith.mulf %198, %197 : vector<8x128xf32>
    %200 = vector.extract_strided_slice %199 {offsets = [0, 0], sizes = [8, 32], strides = [1, 1]} : vector<8x128xf32> to vector<8x32xf32>
    %201 = vector.extract_strided_slice %199 {offsets = [0, 32], sizes = [8, 32], strides = [1, 1]} : vector<8x128xf32> to vector<8x32xf32>
    %202 = vector.extract_strided_slice %199 {offsets = [0, 64], sizes = [8, 32], strides = [1, 1]} : vector<8x128xf32> to vector<8x32xf32>
    %203 = vector.extract_strided_slice %195 {offsets = [0, 96], sizes = [8, 32], strides = [1, 1]} : vector<8x128xf32> to vector<8x32xf32>
    %204 = arith.mulf %201, %169 : vector<8x32xf32>
    %205 = arith.mulf %200, %203 : vector<8x32xf32>
    %206 = arith.addf %204, %205 : vector<8x32xf32>
    %207 = math.tanh %206 : vector<8x32xf32>
    %208 = arith.mulf %202, %207 : vector<8x32xf32>
    %209 = arith.truncf %208 : vector<8x32xf32> to vector<8x32xbf16>
    %210 = vector.extract_strided_slice %11 {offsets = [40, 0], sizes = [8, 128], strides = [1, 1]} : vector<64x128xf32> to vector<8x128xf32>
    %cst_59 = arith.constant dense<0.000000e+00> : vector<8x128xf32>
    %211 = tpu.matmul %190, %12, %cst_59 {dimension_numbers = #tpu.dot_dimension_numbers<[1], [0], [0], [1], [0, 0, 1, 1], [], []>} : vector<8x32xbf16>, vector<32x128xbf16>, vector<8x128xf32> -> vector<8x128xf32>
    %212 = arith.addf %210, %211 : vector<8x128xf32>
    %213 = math.tanh %212 : vector<8x128xf32>
    %cst_60 = arith.constant 1.000000e+00 : f32
    %214 = vector.broadcast %cst_60 : f32 to vector<8x128xf32>
    %215 = arith.addf %213, %214 : vector<8x128xf32>
    %cst_61 = arith.constant 5.000000e-01 : f32
    %216 = vector.broadcast %cst_61 : f32 to vector<8x128xf32>
    %217 = arith.mulf %216, %215 : vector<8x128xf32>
    %218 = vector.extract_strided_slice %217 {offsets = [0, 0], sizes = [8, 32], strides = [1, 1]} : vector<8x128xf32> to vector<8x32xf32>
    %219 = vector.extract_strided_slice %217 {offsets = [0, 32], sizes = [8, 32], strides = [1, 1]} : vector<8x128xf32> to vector<8x32xf32>
    %220 = vector.extract_strided_slice %217 {offsets = [0, 64], sizes = [8, 32], strides = [1, 1]} : vector<8x128xf32> to vector<8x32xf32>
    %221 = vector.extract_strided_slice %213 {offsets = [0, 96], sizes = [8, 32], strides = [1, 1]} : vector<8x128xf32> to vector<8x32xf32>
    %222 = arith.mulf %219, %187 : vector<8x32xf32>
    %223 = arith.mulf %218, %221 : vector<8x32xf32>
    %224 = arith.addf %222, %223 : vector<8x32xf32>
    %225 = math.tanh %224 : vector<8x32xf32>
    %226 = arith.mulf %220, %225 : vector<8x32xf32>
    %227 = arith.truncf %226 : vector<8x32xf32> to vector<8x32xbf16>
    %228 = tpu.concatenate %227, %209 in 1 : vector<8x32xbf16>, vector<8x32xbf16> -> vector<8x64xbf16>
    %cst_62 = arith.constant dense<0.000000e+00> : vector<8x128xf32>
    %229 = tpu.matmul %228, %13, %cst_62 {dimension_numbers = #tpu.dot_dimension_numbers<[1], [0], [0], [1], [0, 0, 1, 1], [], []>} : vector<8x64xbf16>, vector<64x128xbf16>, vector<8x128xf32> -> vector<8x128xf32>
    %230 = vector.broadcast %14 : vector<1x128xf32> to vector<8x128xf32>
    %231 = arith.addf %229, %230 : vector<8x128xf32>
    %232 = math.tanh %231 : vector<8x128xf32>
    %cst_63 = arith.constant 1.000000e+00 : f32
    %233 = vector.broadcast %cst_63 : f32 to vector<8x128xf32>
    %234 = arith.addf %232, %233 : vector<8x128xf32>
    %cst_64 = arith.constant 5.000000e-01 : f32
    %235 = vector.broadcast %cst_64 : f32 to vector<8x128xf32>
    %236 = arith.mulf %235, %234 : vector<8x128xf32>
    %237 = vector.extract_strided_slice %236 {offsets = [0, 0], sizes = [8, 32], strides = [1, 1]} : vector<8x128xf32> to vector<8x32xf32>
    %238 = vector.extract_strided_slice %236 {offsets = [0, 32], sizes = [8, 32], strides = [1, 1]} : vector<8x128xf32> to vector<8x32xf32>
    %239 = vector.extract_strided_slice %236 {offsets = [0, 64], sizes = [8, 32], strides = [1, 1]} : vector<8x128xf32> to vector<8x32xf32>
    %240 = vector.extract_strided_slice %232 {offsets = [0, 96], sizes = [8, 32], strides = [1, 1]} : vector<8x128xf32> to vector<8x32xf32>
    %241 = arith.mulf %238, %206 : vector<8x32xf32>
    %242 = arith.mulf %237, %240 : vector<8x32xf32>
    %243 = arith.addf %241, %242 : vector<8x32xf32>
    %244 = math.tanh %243 : vector<8x32xf32>
    %245 = arith.mulf %239, %244 : vector<8x32xf32>
    %246 = arith.truncf %245 : vector<8x32xf32> to vector<8x32xbf16>
    %247 = vector.extract_strided_slice %11 {offsets = [48, 0], sizes = [8, 128], strides = [1, 1]} : vector<64x128xf32> to vector<8x128xf32>
    %cst_65 = arith.constant dense<0.000000e+00> : vector<8x128xf32>
    %248 = tpu.matmul %227, %12, %cst_65 {dimension_numbers = #tpu.dot_dimension_numbers<[1], [0], [0], [1], [0, 0, 1, 1], [], []>} : vector<8x32xbf16>, vector<32x128xbf16>, vector<8x128xf32> -> vector<8x128xf32>
    %249 = arith.addf %247, %248 : vector<8x128xf32>
    %250 = math.tanh %249 : vector<8x128xf32>
    %cst_66 = arith.constant 1.000000e+00 : f32
    %251 = vector.broadcast %cst_66 : f32 to vector<8x128xf32>
    %252 = arith.addf %250, %251 : vector<8x128xf32>
    %cst_67 = arith.constant 5.000000e-01 : f32
    %253 = vector.broadcast %cst_67 : f32 to vector<8x128xf32>
    %254 = arith.mulf %253, %252 : vector<8x128xf32>
    %255 = vector.extract_strided_slice %254 {offsets = [0, 0], sizes = [8, 32], strides = [1, 1]} : vector<8x128xf32> to vector<8x32xf32>
    %256 = vector.extract_strided_slice %254 {offsets = [0, 32], sizes = [8, 32], strides = [1, 1]} : vector<8x128xf32> to vector<8x32xf32>
    %257 = vector.extract_strided_slice %254 {offsets = [0, 64], sizes = [8, 32], strides = [1, 1]} : vector<8x128xf32> to vector<8x32xf32>
    %258 = vector.extract_strided_slice %250 {offsets = [0, 96], sizes = [8, 32], strides = [1, 1]} : vector<8x128xf32> to vector<8x32xf32>
    %259 = arith.mulf %256, %224 : vector<8x32xf32>
    %260 = arith.mulf %255, %258 : vector<8x32xf32>
    %261 = arith.addf %259, %260 : vector<8x32xf32>
    %262 = math.tanh %261 : vector<8x32xf32>
    %263 = arith.mulf %257, %262 : vector<8x32xf32>
    %264 = arith.truncf %263 : vector<8x32xf32> to vector<8x32xbf16>
    %265 = tpu.concatenate %264, %246 in 1 : vector<8x32xbf16>, vector<8x32xbf16> -> vector<8x64xbf16>
    %cst_68 = arith.constant dense<0.000000e+00> : vector<8x128xf32>
    %266 = tpu.matmul %265, %13, %cst_68 {dimension_numbers = #tpu.dot_dimension_numbers<[1], [0], [0], [1], [0, 0, 1, 1], [], []>} : vector<8x64xbf16>, vector<64x128xbf16>, vector<8x128xf32> -> vector<8x128xf32>
    %267 = vector.broadcast %14 : vector<1x128xf32> to vector<8x128xf32>
    %268 = arith.addf %266, %267 : vector<8x128xf32>
    %269 = math.tanh %268 : vector<8x128xf32>
    %cst_69 = arith.constant 1.000000e+00 : f32
    %270 = vector.broadcast %cst_69 : f32 to vector<8x128xf32>
    %271 = arith.addf %269, %270 : vector<8x128xf32>
    %cst_70 = arith.constant 5.000000e-01 : f32
    %272 = vector.broadcast %cst_70 : f32 to vector<8x128xf32>
    %273 = arith.mulf %272, %271 : vector<8x128xf32>
    %274 = vector.extract_strided_slice %273 {offsets = [0, 0], sizes = [8, 32], strides = [1, 1]} : vector<8x128xf32> to vector<8x32xf32>
    %275 = vector.extract_strided_slice %273 {offsets = [0, 32], sizes = [8, 32], strides = [1, 1]} : vector<8x128xf32> to vector<8x32xf32>
    %276 = vector.extract_strided_slice %273 {offsets = [0, 64], sizes = [8, 32], strides = [1, 1]} : vector<8x128xf32> to vector<8x32xf32>
    %277 = vector.extract_strided_slice %269 {offsets = [0, 96], sizes = [8, 32], strides = [1, 1]} : vector<8x128xf32> to vector<8x32xf32>
    %278 = arith.mulf %275, %243 : vector<8x32xf32>
    %279 = arith.mulf %274, %277 : vector<8x32xf32>
    %280 = arith.addf %278, %279 : vector<8x32xf32>
    %281 = math.tanh %280 : vector<8x32xf32>
    %282 = arith.mulf %276, %281 : vector<8x32xf32>
    %283 = arith.truncf %282 : vector<8x32xf32> to vector<8x32xbf16>
    %284 = vector.extract_strided_slice %11 {offsets = [56, 0], sizes = [8, 128], strides = [1, 1]} : vector<64x128xf32> to vector<8x128xf32>
    %cst_71 = arith.constant dense<0.000000e+00> : vector<8x128xf32>
    %285 = tpu.matmul %264, %12, %cst_71 {dimension_numbers = #tpu.dot_dimension_numbers<[1], [0], [0], [1], [0, 0, 1, 1], [], []>} : vector<8x32xbf16>, vector<32x128xbf16>, vector<8x128xf32> -> vector<8x128xf32>
    %286 = arith.addf %284, %285 : vector<8x128xf32>
    %287 = math.tanh %286 : vector<8x128xf32>
    %cst_72 = arith.constant 1.000000e+00 : f32
    %288 = vector.broadcast %cst_72 : f32 to vector<8x128xf32>
    %289 = arith.addf %287, %288 : vector<8x128xf32>
    %cst_73 = arith.constant 5.000000e-01 : f32
    %290 = vector.broadcast %cst_73 : f32 to vector<8x128xf32>
    %291 = arith.mulf %290, %289 : vector<8x128xf32>
    %292 = vector.extract_strided_slice %291 {offsets = [0, 0], sizes = [8, 32], strides = [1, 1]} : vector<8x128xf32> to vector<8x32xf32>
    %293 = vector.extract_strided_slice %291 {offsets = [0, 32], sizes = [8, 32], strides = [1, 1]} : vector<8x128xf32> to vector<8x32xf32>
    %294 = vector.extract_strided_slice %291 {offsets = [0, 64], sizes = [8, 32], strides = [1, 1]} : vector<8x128xf32> to vector<8x32xf32>
    %295 = vector.extract_strided_slice %287 {offsets = [0, 96], sizes = [8, 32], strides = [1, 1]} : vector<8x128xf32> to vector<8x32xf32>
    %296 = arith.mulf %293, %261 : vector<8x32xf32>
    %297 = arith.mulf %292, %295 : vector<8x32xf32>
    %298 = arith.addf %296, %297 : vector<8x32xf32>
    %299 = math.tanh %298 : vector<8x32xf32>
    %300 = arith.mulf %294, %299 : vector<8x32xf32>
    %301 = arith.truncf %300 : vector<8x32xf32> to vector<8x32xbf16>
    %302 = tpu.concatenate %301, %283 in 1 : vector<8x32xbf16>, vector<8x32xbf16> -> vector<8x64xbf16>
    %cst_74 = arith.constant dense<0.000000e+00> : vector<8x128xf32>
    %303 = tpu.matmul %302, %13, %cst_74 {dimension_numbers = #tpu.dot_dimension_numbers<[1], [0], [0], [1], [0, 0, 1, 1], [], []>} : vector<8x64xbf16>, vector<64x128xbf16>, vector<8x128xf32> -> vector<8x128xf32>
    %304 = vector.broadcast %14 : vector<1x128xf32> to vector<8x128xf32>
    %305 = arith.addf %303, %304 : vector<8x128xf32>
    %306 = math.tanh %305 : vector<8x128xf32>
    %cst_75 = arith.constant 1.000000e+00 : f32
    %307 = vector.broadcast %cst_75 : f32 to vector<8x128xf32>
    %308 = arith.addf %306, %307 : vector<8x128xf32>
    %cst_76 = arith.constant 5.000000e-01 : f32
    %309 = vector.broadcast %cst_76 : f32 to vector<8x128xf32>
    %310 = arith.mulf %309, %308 : vector<8x128xf32>
    %311 = vector.extract_strided_slice %310 {offsets = [0, 0], sizes = [8, 32], strides = [1, 1]} : vector<8x128xf32> to vector<8x32xf32>
    %312 = vector.extract_strided_slice %310 {offsets = [0, 32], sizes = [8, 32], strides = [1, 1]} : vector<8x128xf32> to vector<8x32xf32>
    %313 = vector.extract_strided_slice %310 {offsets = [0, 64], sizes = [8, 32], strides = [1, 1]} : vector<8x128xf32> to vector<8x32xf32>
    %314 = vector.extract_strided_slice %306 {offsets = [0, 96], sizes = [8, 32], strides = [1, 1]} : vector<8x128xf32> to vector<8x32xf32>
    %315 = arith.mulf %312, %280 : vector<8x32xf32>
    %316 = arith.mulf %311, %314 : vector<8x32xf32>
    %317 = arith.addf %315, %316 : vector<8x32xf32>
    %318 = math.tanh %317 : vector<8x32xf32>
    %319 = arith.mulf %313, %318 : vector<8x32xf32>
    %320 = arith.truncf %319 : vector<8x32xf32> to vector<8x32xbf16>
    %c0_77 = arith.constant 0 : index
    %c0_78 = arith.constant 0 : index
    %321 = vector.load %arg9[%c0_77, %c0_78] : memref<32x32xbf16, #tpu.memory_space<vmem>>, vector<32x32xbf16>
    %cst_79 = arith.constant dense<0.000000e+00> : vector<8x32xf32>
    %322 = tpu.matmul %320, %321, %cst_79 {dimension_numbers = #tpu.dot_dimension_numbers<[1], [0], [0], [1], [0, 0, 1, 1], [], []>} : vector<8x32xbf16>, vector<32x32xbf16>, vector<8x32xf32> -> vector<8x32xf32>
    %323 = arith.addf %322, %5 : vector<8x32xf32>
    %cst_80 = arith.constant 0.000000e+00 : f32
    %324 = vector.broadcast %cst_80 : f32 to vector<8x32xf32>
    %325 = arith.maximumf %323, %324 : vector<8x32xf32>
    %326 = arith.truncf %325 : vector<8x32xf32> to vector<8x32xbf16>
    %c0_81 = arith.constant 0 : index
    %c0_82 = arith.constant 0 : index
    %327 = vector.load %arg12[%c0_81, %c0_82] : memref<32x2xbf16, #tpu.memory_space<vmem>>, vector<32x2xbf16>
    %cst_83 = arith.constant dense<0.000000e+00> : vector<8x2xf32>
    %328 = tpu.matmul %326, %327, %cst_83 {dimension_numbers = #tpu.dot_dimension_numbers<[1], [0], [0], [1], [0, 0, 1, 1], [], []>} : vector<8x32xbf16>, vector<32x2xbf16>, vector<8x2xf32> -> vector<8x2xf32>
    %c0_84 = arith.constant 0 : index
    %c0_85 = arith.constant 0 : index
    %329 = vector.load %arg13[%c0_84, %c0_85] : memref<1x2xf32, #tpu.memory_space<vmem>>, vector<1x2xf32>
    %330 = vector.broadcast %329 : vector<1x2xf32> to vector<8x2xf32>
    %331 = arith.addf %328, %330 : vector<8x2xf32>
    %c0_86 = arith.constant 0 : index
    %c0_87 = arith.constant 0 : index
    %332 = vector.load %arg14[%c0_86, %c0_87] : memref<8x2xf32, #tpu.memory_space<vmem>>, vector<8x2xf32>
    tpu.vector_store %arg14[%c0_86, %c0_87], %331 {strides = array<i32>} : memref<8x2xf32, #tpu.memory_space<vmem>>, vector<8x2xf32>,
    return
  }
}

</mosaic_0001>

<llo_original>
// kernel: tpu_custom_call.1
$region0: #{tpu_custom_call.1}
  #allocation0 [shape = 'u32[]', space=smem, size = 0x4, offset = 0x4, fixed_abs, tag = 'smem constant byte address 0x4 - core index']
  #allocation1 [shape = 'u32[144,128]{1,0:T(1,128)}', space=vmem, size = 0x12000, scoped, tag = 'internal scratch']
  %s0 = inlined_call_operand.vmem [shape: bf16[64,8], index: 0, kind: input, shape index: {}]
  %s1 = inlined_call_operand.vmem [shape: bf16[8,4], index: 1, kind: input, shape index: {}]
  %s2 = inlined_call_operand.vmem [shape: f32[2,8,32], index: 2, kind: input, shape index: {}]
  %s3 = inlined_call_operand.vmem [shape: f32[2,8,32], index: 3, kind: input, shape index: {}]
  %s4 = inlined_call_operand.hbm [shape: bf16[8,128], index: 4, kind: input, shape index: {}]
  %s5 = inlined_call_operand.hbm [shape: bf16[32,128], index: 5, kind: input, shape index: {}]
  %s6 = inlined_call_operand.vmem [shape: f32[1,128], index: 6, kind: input, shape index: {}]
  %s7 = inlined_call_operand.vmem [shape: bf16[64,128], index: 7, kind: input, shape index: {}]
  %s8 = inlined_call_operand.vmem [shape: f32[1,128], index: 8, kind: input, shape index: {}]
  %s9 = inlined_call_operand.vmem [shape: bf16[32,32], index: 9, kind: input, shape index: {}]
  %s10 = inlined_call_operand.vmem [shape: bf16[4,32], index: 10, kind: input, shape index: {}]
  %s11 = inlined_call_operand.vmem [shape: f32[1,32], index: 11, kind: input, shape index: {}]
  %s12 = inlined_call_operand.vmem [shape: bf16[32,2], index: 12, kind: input, shape index: {}]
  %s13 = inlined_call_operand.vmem [shape: f32[1,2], index: 13, kind: input, shape index: {}]
  %s14 = inlined_call_operand.vmem [shape: f32[8,2], index: 14, kind: output, shape index: {}]
  %s15 = sld [smem:[#allocation0]]
  $region74: #{tpu_custom_call.1} parent=0
    _
  %s17 = ssub.s32 1, %s15
  %s18 = scalar_select 0, %s17, %s15
  $region1: #{tpu_custom_call.1} parent=0
    #allocation2 [shape = 'u8[2048]{0}', space=vmem, size = 0x800, scoped, tag = 'input window, operand 4, single buffered']
    #allocation3 [shape = 's32[1]{0}', space=sflag, size = 0x4, scoped, tag = 'scoped memory for tpu_custom_call.1']
    #allocation4 [shape = 'u8[8192]{0}', space=vmem, size = 0x2000, scoped, tag = 'input window, operand 5, single buffered']
    #allocation5 [shape = 's32[1]{0}', space=sflag, size = 0x4, scoped, tag = 'scoped memory for tpu_custom_call.1']
    %19 = vsyncpa [#allocation3], 0
    %20 = vsyncpa [#allocation5], 0
    // Predicated region
    $region2: #{tpu_custom_call.1} parent=1 // pred_check
      _
    $region3: #{tpu_custom_call.1} parent=1 // pred_check_branch
      %22 = sbr.rel (0) target = $region5
    $region4: #{tpu_custom_call.1} parent=1 // pred_region
      _
    $region5: #{tpu_custom_call.1} parent=1 // pred_fallthru
      _
    // Predicated region
    $region6: #{tpu_custom_call.1} parent=1 // pred_check
      _
    $region7: #{tpu_custom_call.1} parent=1 // pred_check_branch
      %24 = sbr.rel (0) target = $region9
    $region8: #{tpu_custom_call.1} parent=1 // pred_region
      _
    $region9: #{tpu_custom_call.1} parent=1 // pred_fallthru
      _
    // Predicated region
    $region10: #{tpu_custom_call.1} parent=1 // pred_check
      _
    $region11: #{tpu_custom_call.1} parent=1 // pred_check_branch
      %26 = sbr.rel (0) target = $region13
    $region12: #{tpu_custom_call.1} parent=1 // pred_region
      _
    $region13: #{tpu_custom_call.1} parent=1 // pred_fallthru
      _
    // Predicated region
    $region14: #{tpu_custom_call.1} parent=1 // pred_check
      _
    $region15: #{tpu_custom_call.1} parent=1 // pred_check_branch
      %28 = sbr.rel (0) target = $region17
    $region16: #{tpu_custom_call.1} parent=1 // pred_region
      _
    $region17: #{tpu_custom_call.1} parent=1 // pred_fallthru
      _
    // Predicated region
    $region18: #{tpu_custom_call.1} parent=1 // pred_check
      _
    $region19: #{tpu_custom_call.1} parent=1 // pred_check_branch
      %30 = sbr.rel (0) target = $region21
    $region20: #{tpu_custom_call.1} parent=1 // pred_region
      %s32 = ssub.s32 64, 64
      %33 = vsyncadd [#allocation3], %s32
      %s35 = sshll.u32 [#allocation2], 4
      %s36 = int_to_ptr.vmem [resolvable:$true] %s35
      %38 = dma.hbm_to_vmem [thread:$0]  %s4, 64, %s36, [#allocation3]
    $region21: #{tpu_custom_call.1} parent=1 // pred_fallthru
      _
    // Predicated region
    $region22: #{tpu_custom_call.1} parent=1 // pred_check
      _
    $region23: #{tpu_custom_call.1} parent=1 // pred_check_branch
      %40 = sbr.rel (0) target = $region25
    $region24: #{tpu_custom_call.1} parent=1 // pred_region
      %s42 = ssub.s32 256, 256
      %43 = vsyncadd [#allocation5], %s42
      %s44 = sshll.u32 [#allocation4], 4
      %s45 = int_to_ptr.vmem [resolvable:$true] %s44
      %50 = dma.hbm_to_vmem [thread:$0]  %s5, 256, %s45, [#allocation5], 64, 64, 4
    $region25: #{tpu_custom_call.1} parent=1 // pred_fallthru
      _
    // Predicated region
    $region26: #{tpu_custom_call.1} parent=1 // pred_check
      _
    $region27: #{tpu_custom_call.1} parent=1 // pred_check_branch
      %52 = sbr.rel (0) target = $region29
    $region28: #{tpu_custom_call.1} parent=1 // pred_region
      _
    $region29: #{tpu_custom_call.1} parent=1 // pred_fallthru
      _
    // Predicated region
    $region30: #{tpu_custom_call.1} parent=1 // pred_check
      _
    $region31: #{tpu_custom_call.1} parent=1 // pred_check_branch
      %54 = sbr.rel (0) target = $region33
    $region32: #{tpu_custom_call.1} parent=1 // pred_region
      _
    $region33: #{tpu_custom_call.1} parent=1 // pred_fallthru
      _
    // Predicated region
    $region34: #{tpu_custom_call.1} parent=1 // pred_check
      _
    $region35: #{tpu_custom_call.1} parent=1 // pred_check_branch
      %56 = sbr.rel (0) target = $region37
    $region36: #{tpu_custom_call.1} parent=1 // pred_region
      _
    $region37: #{tpu_custom_call.1} parent=1 // pred_fallthru
      _
    // Predicated region
    $region38: #{tpu_custom_call.1} parent=1 // pred_check
      _
    $region39: #{tpu_custom_call.1} parent=1 // pred_check_branch
      %58 = sbr.rel (0) target = $region41
    $region40: #{tpu_custom_call.1} parent=1 // pred_region
      _
    $region41: #{tpu_custom_call.1} parent=1 // pred_fallthru
      _
    // Predicated region
    $region42: #{tpu_custom_call.1} parent=1 // pred_check
      _
    $region43: #{tpu_custom_call.1} parent=1 // pred_check_branch
      %60 = sbr.rel (0) target = $region45
    $region44: #{tpu_custom_call.1} parent=1 // pred_region
      _
    $region45: #{tpu_custom_call.1} parent=1 // pred_fallthru
      _
    // Predicated region
    $region46: #{tpu_custom_call.1} parent=1 // pred_check
      _
    $region47: #{tpu_custom_call.1} parent=1 // pred_check_branch
      %62 = sbr.rel (0) target = $region49
    $region48: #{tpu_custom_call.1} parent=1 // pred_region
      _
    $region49: #{tpu_custom_call.1} parent=1 // pred_fallthru
      _
    // Predicated region
    $region50: #{tpu_custom_call.1} parent=1 // pred_check
      _
    $region51: #{tpu_custom_call.1} parent=1 // pred_check_branch
      %64 = sbr.rel (0) target = $region53
    $region52: #{tpu_custom_call.1} parent=1 // pred_region
      _
    $region53: #{tpu_custom_call.1} parent=1 // pred_fallthru
      _
    // Predicated region
    $region54: #{tpu_custom_call.1} parent=1 // pred_check
      _
    $region55: #{tpu_custom_call.1} parent=1 // pred_check_branch
      %66 = sbr.rel (0) target = $region57
    $region56: #{tpu_custom_call.1} parent=1 // pred_region
      _
    $region57: #{tpu_custom_call.1} parent=1 // pred_fallthru
      _
    // Predicated region
    $region58: #{tpu_custom_call.1} parent=1 // pred_check
      _
    $region59: #{tpu_custom_call.1} parent=1 // pred_check_branch
      %68 = sbr.rel (0) target = $region61
    $region60: #{tpu_custom_call.1} parent=1 // pred_region
      %69 = dma.done [#allocation3], 64
    $region61: #{tpu_custom_call.1} parent=1 // pred_fallthru
      _
    // Predicated region
    $region62: #{tpu_custom_call.1} parent=1 // pred_check
      _
    $region63: #{tpu_custom_call.1} parent=1 // pred_check_branch
      %71 = sbr.rel (0) target = $region65
    $region64: #{tpu_custom_call.1} parent=1 // pred_region
      %72 = dma.done [#allocation5], 256
    $region65: #{tpu_custom_call.1} parent=1 // pred_fallthru
      _
    %v74 = vld [vmem:[%s1] sm:$0xf]
    %v75 = vld [vmem:[%s10] sm:$0x3]
    %v76 = vld [vmem:[%s11] sm:$0x1]
    %v78 = vlaneseq
    %v79 = vshrl.u32 %v78, 7
    %v80 = vsub.s32 0, %v79
    %v81 = vrot.slane %v76, %v80
    %vm83 = vcmask 31744
    %v85 = vsel %vm83, %v74, 0
    %vm87 = vcmask 1041408
    %v89 = vsel %vm87, %v75, 0
    %91 = vmatprep.subr.bf16.mxu0 0
    %92 = vmatpush1.bf16.msra.mxu0 %v89
    %93 = vmatprep.subr.bf16.mxu0 0
    %94 = vmatpush1.bf16.msra.mxu0 0
    %95 = vmatprep.subr.bf16.mxu0 0
    %96 = vmatpush1.bf16.msra.mxu0 0
    %97 = vmatprep.subr.bf16.mxu0 0
    %98 = vmatpush1.bf16.msra.mxu0 0
    %99 = vmatprep.subr.bf16.mxu0 0
    %100 = vmatpush1.bf16.msra.mxu0 0
    %101 = vmatprep.subr.bf16.mxu0 0
    %102 = vmatpush1.bf16.msra.mxu0 0
    %103 = vmatprep.subr.bf16.mxu0 0
    %104 = vmatpush1.bf16.msra.mxu0 0
    %105 = vmatprep.subr.bf16.mxu0 0
    %106 = vmatpush1.bf16.msra.mxu0 0
    %107 = vmatprep.subr.bf16.mxu0 0
    %108 = vmatpush1.bf16.msra.mxu0 0
    %109 = vmatprep.subr.bf16.mxu0 0
    %110 = vmatpush1.bf16.msra.mxu0 0
    %111 = vmatprep.subr.bf16.mxu0 0
    %112 = vmatpush1.bf16.msra.mxu0 0
    %113 = vmatprep.subr.bf16.mxu0 0
    %114 = vmatpush1.bf16.msra.mxu0 0
    %115 = vmatprep.subr.bf16.mxu0 0
    %116 = vmatpush1.bf16.msra.mxu0 0
    %117 = vmatprep.subr.bf16.mxu0 0
    %118 = vmatpush1.bf16.msra.mxu0 0
    %119 = vmatprep.subr.bf16.mxu0 0
    %120 = vmatpush1.bf16.msra.mxu0 0
    %121 = vmatprep.subr.bf16.mxu0 0
    %122 = vmatpush1.bf16.msra.mxu0 0
    %123 = vmatprep.mubr.bf16.mxu0 0
    %124 = vmatmul.mubr.bf16.gmra.mrb[0].mxu0 %v85
    %v125 = vpop.f32.mrb[0].mxu0
    %v126 = vadd.f32 %v81, %v125
    %v127 = vpop.f32.mrb[0].mxu0
    %v128 = vpop.f32.mrb[0].mxu0
    %v129 = vpop.f32.mrb[0].mxu0
    %130 = vdwg.mxu0
    %v131 = vld [vmem:[%s0] sm:$0xf]
    %v132 = vld [vmem:[%s0 + $0x4] sm:$0xf]
    %v133 = vld [vmem:[%s0 + $0x8] sm:$0xf]
    %v134 = vld [vmem:[%s0 + $0xc] sm:$0xf]
    %v135 = vld [vmem:[%s0 + $0x10] sm:$0xf]
    %v136 = vld [vmem:[%s0 + $0x14] sm:$0xf]
    %v137 = vld [vmem:[%s0 + $0x18] sm:$0xf]
    %v138 = vld [vmem:[%s0 + $0x1c] sm:$0xf]
    %v139 = vld [vmem:[#allocation2] sm:$0xf]
    %v140 = vld [vmem:[%s6] sm:$0x1]
    %v142 = vlaneseq
    %v143 = vshrl.u32 %v142, 7
    %v144 = vsub.s32 0, %v143
    %v145 = vrot.slane %v140, %v144
    %v155 = vunpack.c.l.b16 %v131
    %v156 = vunpack.c.l.b16 %v132
    %v157 = vunpack.c.l.b16 %v133
    %v158 = vunpack.c.l.b16 %v134
    %v159 = vunpack.c.l.b16 %v135
    %v160 = vunpack.c.l.b16 %v136
    %v161 = vunpack.c.l.b16 %v137
    %v162 = vunpack.c.l.b16 %v138
    %v163 = vpack.c.b16 %v156, %v155
    %v164 = vpack.c.b16 %v158, %v157
    %v165 = vpack.c.b16 %v160, %v159
    %v166 = vpack.c.b16 %v162, %v161
    %vm167 = vcmask 64512
    %v169 = vsel %vm167, %v163, 0
    %v172 = vsel %vm167, %v164, 0
    %v175 = vsel %vm167, %v165, 0
    %v178 = vsel %vm167, %v166, 0
    %vm180 = vcmask 1043456
    %v182 = vsel %vm180, %v139, 0
    %184 = vmatprep.subr.bf16.mxu0 0
    %185 = vmatpush1.bf16.msra.mxu0 %v182
    %186 = vmatprep.subr.bf16.mxu0 0
    %187 = vmatpush1.bf16.msra.mxu0 0
    %188 = vmatprep.subr.bf16.mxu0 0
    %189 = vmatpush1.bf16.msra.mxu0 0
    %190 = vmatprep.subr.bf16.mxu0 0
    %191 = vmatpush1.bf16.msra.mxu0 0
    %192 = vmatprep.subr.bf16.mxu0 0
    %193 = vmatpush1.bf16.msra.mxu0 0
    %194 = vmatprep.subr.bf16.mxu0 0
    %195 = vmatpush1.bf16.msra.mxu0 0
    %196 = vmatprep.subr.bf16.mxu0 0
    %197 = vmatpush1.bf16.msra.mxu0 0
    %198 = vmatprep.subr.bf16.mxu0 0
    %199 = vmatpush1.bf16.msra.mxu0 0
    %200 = vmatprep.subr.bf16.mxu0 0
    %201 = vmatpush1.bf16.msra.mxu0 0
    %202 = vmatprep.subr.bf16.mxu0 0
    %203 = vmatpush1.bf16.msra.mxu0 0
    %204 = vmatprep.subr.bf16.mxu0 0
    %205 = vmatpush1.bf16.msra.mxu0 0
    %206 = vmatprep.subr.bf16.mxu0 0
    %207 = vmatpush1.bf16.msra.mxu0 0
    %208 = vmatprep.subr.bf16.mxu0 0
    %209 = vmatpush1.bf16.msra.mxu0 0
    %210 = vmatprep.subr.bf16.mxu0 0
    %211 = vmatpush1.bf16.msra.mxu0 0
    %212 = vmatprep.subr.bf16.mxu0 0
    %213 = vmatpush1.bf16.msra.mxu0 0
    %214 = vmatprep.subr.bf16.mxu0 0
    %215 = vmatpush1.bf16.msra.mxu0 0
    %216 = vmatprep.mubr.bf16.mxu0 0
    %217 = vmatmul.mubr.bf16.gmra.mrb[0].mxu0 %v169
    %v218 = vpop.f32.mrb[0].mxu0
    %v219 = vadd.f32 %v145, %v218
    %v220 = vpop.f32.mrb[0].mxu0
    %v221 = vpop.f32.mrb[0].mxu0
    %v222 = vadd.f32 %v145, %v221
    %v223 = vpop.f32.mrb[0].mxu0
    %224 = vmatprep.mubr.bf16.mxu0 0
    %225 = vmatmul.mubr.bf16.gmra.mrb[0].mxu0 %v172
    %v226 = vpop.f32.mrb[0].mxu0
    %v227 = vadd.f32 %v145, %v226
    %v228 = vpop.f32.mrb[0].mxu0
    %v229 = vpop.f32.mrb[0].mxu0
    %v230 = vadd.f32 %v145, %v229
    %v231 = vpop.f32.mrb[0].mxu0
    %232 = vmatprep.mubr.bf16.mxu0 0
    %233 = vmatmul.mubr.bf16.gmra.mrb[0].mxu0 %v175
    %v234 = vpop.f32.mrb[0].mxu0
    %v235 = vadd.f32 %v145, %v234
    %v236 = vpop.f32.mrb[0].mxu0
    %v237 = vpop.f32.mrb[0].mxu0
    %v238 = vadd.f32 %v145, %v237
    %v239 = vpop.f32.mrb[0].mxu0
    %240 = vmatprep.mubr.bf16.mxu0 0
    %241 = vmatmul.mubr.bf16.gmra.mrb[0].mxu0 %v178
    %v242 = vpop.f32.mrb[0].mxu0
    %v243 = vadd.f32 %v145, %v242
    %v244 = vpop.f32.mrb[0].mxu0
    %v245 = vpop.f32.mrb[0].mxu0
    %v246 = vadd.f32 %v145, %v245
    %v247 = vpop.f32.mrb[0].mxu0
    %248 = vdwg.mxu0
    %v249 = vld [vmem:[#allocation4] sm:$0xf]
    %v250 = vld [vmem:[#allocation4 + $0x4] sm:$0xf]
    %v251 = vld [vmem:[#allocation4 + $0x8] sm:$0xf]
    %v252 = vld [vmem:[#allocation4 + $0xc] sm:$0xf]
    %v253 = vld [vmem:[%s7] sm:$0xf]
    %v254 = vld [vmem:[%s7 + $0x4] sm:$0xf]
    %v255 = vld [vmem:[%s7 + $0x8] sm:$0xf]
    %v256 = vld [vmem:[%s7 + $0xc] sm:$0xf]
    %v257 = vld [vmem:[%s7 + $0x10] sm:$0xf]
    %v258 = vld [vmem:[%s7 + $0x14] sm:$0xf]
    %v259 = vld [vmem:[%s7 + $0x18] sm:$0xf]
    %v260 = vld [vmem:[%s7 + $0x1c] sm:$0xf]
    %v261 = vld [vmem:[%s8] sm:$0x1]
    %v262 = vld [vmem:[%s2] sm:$0xff]
    %s263 = scalar_lea.vmem %s2, 8
    %v264 = vld [vmem:[%s263] sm:$0xff]
    %v265 = vld [vmem:[%s3] sm:$0xff]
    %s266 = scalar_lea.vmem %s3, 8
    %v267 = vld [vmem:[%s266] sm:$0xff]
    %v268 = vpack.c.bf16 %v262, %v262
    %v269 = vpack.c.bf16 %v264, %v264
    %v274 = vunpack.c.l.b16 %v249
    %v275 = vunpack.c.l.b16 %v250
    %v276 = vunpack.c.l.b16 %v251
    %v277 = vunpack.c.l.b16 %v252
    %v278 = vpack.c.b16 %v275, %v274
    %v279 = vpack.c.b16 %v277, %v276
    %vm282 = vcmask 261120
    %v284 = vsel %vm282, %v268, 0
    %286 = vmatprep.subr.bf16.mxu0 0
    %287 = vmatpush1.bf16.msra.mxu0 %v278
    %288 = vmatprep.subr.bf16.mxu0 0
    %289 = vmatpush1.bf16.msra.mxu0 %v279
    %290 = vmatprep.subr.bf16.mxu0 0
    %291 = vmatpush1.bf16.msra.mxu0 0
    %292 = vmatprep.subr.bf16.mxu0 0
    %293 = vmatpush1.bf16.msra.mxu0 0
    %294 = vmatprep.subr.bf16.mxu0 0
    %295 = vmatpush1.bf16.msra.mxu0 0
    %296 = vmatprep.subr.bf16.mxu0 0
    %297 = vmatpush1.bf16.msra.mxu0 0
    %298 = vmatprep.subr.bf16.mxu0 0
    %299 = vmatpush1.bf16.msra.mxu0 0
    %300 = vmatprep.subr.bf16.mxu0 0
    %301 = vmatpush1.bf16.msra.mxu0 0
    %302 = vmatprep.subr.bf16.mxu0 0
    %303 = vmatpush1.bf16.msra.mxu0 0
    %304 = vmatprep.subr.bf16.mxu0 0
    %305 = vmatpush1.bf16.msra.mxu0 0
    %306 = vmatprep.subr.bf16.mxu0 0
    %307 = vmatpush1.bf16.msra.mxu0 0
    %308 = vmatprep.subr.bf16.mxu0 0
    %309 = vmatpush1.bf16.msra.mxu0 0
    %310 = vmatprep.subr.bf16.mxu0 0
    %311 = vmatpush1.bf16.msra.mxu0 0
    %312 = vmatprep.subr.bf16.mxu0 0
    %313 = vmatpush1.bf16.msra.mxu0 0
    %314 = vmatprep.subr.bf16.mxu0 0
    %315 = vmatpush1.bf16.msra.mxu0 0
    %316 = vmatprep.subr.bf16.mxu0 0
    %317 = vmatpush1.bf16.msra.mxu0 0
    %318 = vmatprep.mubr.bf16.mxu0 0
    %319 = vmatmul.mubr.bf16.gmra.mrb[0].mxu0 %v284
    %v320 = vpop.f32.mrb[0].mxu0
    %v321 = vadd.f32 0.0, %v320
    %v322 = vpop.f32.mrb[0].mxu0
    %v323 = vpop.f32.mrb[0].mxu0
    %v324 = vpop.f32.mrb[0].mxu0
    %325 = vdwg.mxu0
    %v326 = vadd.f32 %v219, %v321
    %v327 = vtanh.pop %v326
    %v328 = vadd.f32 %v327, 1.0
    %v329 = vmul.f32 %v328, 0.5
    %331 = vrot.lane.b32.xlu0 %v265, 32
    %v332 = vpop.permute.xlu0 %331
    %v334 = vmul.f32 %v329, %v332
    %336 = vrot.lane.b32.xlu0 %v327, 32
    %v337 = vpop.permute.xlu0 %336
    %v339 = vmul.f32 %v329, %v337
    %341 = vrot.lane.b32.xlu0 %v339, 32
    %v342 = vpop.permute.xlu0 %341
    %v344 = vadd.f32 %v334, %v342
    %v345 = vtanh.pop %v344
    %347 = vrot.lane.b32.xlu0 %v345, 32
    %v348 = vpop.permute.xlu0 %347
    %v350 = vmul.f32 %v329, %v348
    %v351 = vpack.c.bf16 %v350, %v350
    %353 = vrot.lane.b32.xlu0 %v351, 64
    %v354 = vpop.permute.xlu0 %353
    %356 = vrot.lane.b32.xlu0 %v269, 32
    %v357 = vpop.permute.xlu0 %356
    %v360 = vsel %vm282, %v354, %v357
    %v362 = vlaneseq
    %v363 = vshrl.u32 %v362, 7
    %v364 = vsub.s32 0, %v363
    %v365 = vrot.slane %v261, %v364
    %v375 = vunpack.c.l.b16 %v253
    %v376 = vunpack.c.l.b16 %v254
    %v377 = vunpack.c.l.b16 %v255
    %v378 = vunpack.c.l.b16 %v256
    %v379 = vunpack.c.l.b16 %v257
    %v380 = vunpack.c.l.b16 %v258
    %v381 = vunpack.c.l.b16 %v259
    %v382 = vunpack.c.l.b16 %v260
    %v383 = vpack.c.b16 %v376, %v375
    %v384 = vpack.c.b16 %v378, %v377
    %v385 = vpack.c.b16 %v380, %v379
    %v386 = vpack.c.b16 %v382, %v381
    %vm391 = vcmask 523264
    %v392 = vsel %vm391, %v360, 0
    %394 = vmatprep.subr.bf16.mxu0 0
    %395 = vmatpush1.bf16.msra.mxu0 %v383
    %396 = vmatprep.subr.bf16.mxu0 0
    %397 = vmatpush1.bf16.msra.mxu0 %v384
    %398 = vmatprep.subr.bf16.mxu0 0
    %399 = vmatpush1.bf16.msra.mxu0 %v385
    %400 = vmatprep.subr.bf16.mxu0 0
    %401 = vmatpush1.bf16.msra.mxu0 %v386
    %402 = vmatprep.subr.bf16.mxu0 0
    %403 = vmatpush1.bf16.msra.mxu0 0
    %404 = vmatprep.subr.bf16.mxu0 0
    %405 = vmatpush1.bf16.msra.mxu0 0
    %406 = vmatprep.subr.bf16.mxu0 0
    %407 = vmatpush1.bf16.msra.mxu0 0
    %408 = vmatprep.subr.bf16.mxu0 0
    %409 = vmatpush1.bf16.msra.mxu0 0
    %410 = vmatprep.subr.bf16.mxu0 0
    %411 = vmatpush1.bf16.msra.mxu0 0
    %412 = vmatprep.subr.bf16.mxu0 0
    %413 = vmatpush1.bf16.msra.mxu0 0
    %414 = vmatprep.subr.bf16.mxu0 0
    %415 = vmatpush1.bf16.msra.mxu0 0
    %416 = vmatprep.subr.bf16.mxu0 0
    %417 = vmatpush1.bf16.msra.mxu0 0
    %418 = vmatprep.subr.bf16.mxu0 0
    %419 = vmatpush1.bf16.msra.mxu0 0
    %420 = vmatprep.subr.bf16.mxu0 0
    %421 = vmatpush1.bf16.msra.mxu0 0
    %422 = vmatprep.subr.bf16.mxu0 0
    %423 = vmatpush1.bf16.msra.mxu0 0
    %424 = vmatprep.subr.bf16.mxu0 0
    %425 = vmatpush1.bf16.msra.mxu0 0
    %426 = vmatprep.mubr.bf16.mxu0 0
    %427 = vmatmul.mubr.bf16.gmra.mrb[0].mxu0 %v392
    %v428 = vpop.f32.mrb[0].mxu0
    %v429 = vadd.f32 %v365, %v428
    %v430 = vpop.f32.mrb[0].mxu0
    %v431 = vpop.f32.mrb[0].mxu0
    %v432 = vpop.f32.mrb[0].mxu0
    %433 = vdwg.mxu0
    %v434 = vtanh.pop %v429
    %v435 = vadd.f32 %v434, 1.0
    %v436 = vmul.f32 %v435, 0.5
    %438 = vrot.lane.b32.xlu0 %v267, 32
    %v439 = vpop.permute.xlu0 %438
    %v441 = vmul.f32 %v436, %v439
    %443 = vrot.lane.b32.xlu0 %v434, 32
    %v444 = vpop.permute.xlu0 %443
    %v446 = vmul.f32 %v436, %v444
    %448 = vrot.lane.b32.xlu0 %v446, 32
    %v449 = vpop.permute.xlu0 %448
    %v451 = vadd.f32 %v441, %v449
    %v452 = vtanh.pop %v451
    %454 = vrot.lane.b32.xlu0 %v452, 32
    %v455 = vpop.permute.xlu0 %454
    %v457 = vmul.f32 %v436, %v455
    %v458 = vpack.c.bf16 %v457, %v457
    %v459 = vsel %vm282, %v354, 0
    %461 = vmatprep.subr.bf16.mxu0 0
    %462 = vmatpush1.bf16.msra.mxu0 %v278
    %463 = vmatprep.subr.bf16.mxu0 0
    %464 = vmatpush1.bf16.msra.mxu0 %v279
    %465 = vmatprep.subr.bf16.mxu0 0
    %466 = vmatpush1.bf16.msra.mxu0 0
    %467 = vmatprep.subr.bf16.mxu0 0
    %468 = vmatpush1.bf16.msra.mxu0 0
    %469 = vmatprep.subr.bf16.mxu0 0
    %470 = vmatpush1.bf16.msra.mxu0 0
    %471 = vmatprep.subr.bf16.mxu0 0
    %472 = vmatpush1.bf16.msra.mxu0 0
    %473 = vmatprep.subr.bf16.mxu0 0
    %474 = vmatpush1.bf16.msra.mxu0 0
    %475 = vmatprep.subr.bf16.mxu0 0
    %476 = vmatpush1.bf16.msra.mxu0 0
    %477 = vmatprep.subr.bf16.mxu0 0
    %478 = vmatpush1.bf16.msra.mxu0 0
    %479 = vmatprep.subr.bf16.mxu0 0
    %480 = vmatpush1.bf16.msra.mxu0 0
    %481 = vmatprep.subr.bf16.mxu0 0
    %482 = vmatpush1.bf16.msra.mxu0 0
    %483 = vmatprep.subr.bf16.mxu0 0
    %484 = vmatpush1.bf16.msra.mxu0 0
    %485 = vmatprep.subr.bf16.mxu0 0
    %486 = vmatpush1.bf16.msra.mxu0 0
    %487 = vmatprep.subr.bf16.mxu0 0
    %488 = vmatpush1.bf16.msra.mxu0 0
    %489 = vmatprep.subr.bf16.mxu0 0
    %490 = vmatpush1.bf16.msra.mxu0 0
    %491 = vmatprep.subr.bf16.mxu0 0
    %492 = vmatpush1.bf16.msra.mxu0 0
    %493 = vmatprep.mubr.bf16.mxu0 0
    %494 = vmatmul.mubr.bf16.gmra.mrb[0].mxu0 %v459
    %v495 = vpop.f32.mrb[0].mxu0
    %v496 = vadd.f32 0.0, %v495
    %v497 = vpop.f32.mrb[0].mxu0
    %v498 = vpop.f32.mrb[0].mxu0
    %v499 = vpop.f32.mrb[0].mxu0
    %500 = vdwg.mxu0
    %v501 = vadd.f32 %v222, %v496
    %v502 = vtanh.pop %v501
    %v503 = vadd.f32 %v502, 1.0
    %v504 = vmul.f32 %v503, 0.5
    %v505 = vmul.f32 %v504, %v344
    %507 = vrot.lane.b32.xlu0 %v502, 32
    %v508 = vpop.permute.xlu0 %507
    %v510 = vmul.f32 %v504, %v508
    %512 = vrot.lane.b32.xlu0 %v510, 32
    %v513 = vpop.permute.xlu0 %512
    %v515 = vadd.f32 %v505, %v513
    %v516 = vtanh.pop %v515
    %518 = vrot.lane.b32.xlu0 %v516, 32
    %v519 = vpop.permute.xlu0 %518
    %v521 = vmul.f32 %v504, %v519
    %v522 = vpack.c.bf16 %v521, %v521
    %524 = vrot.lane.b32.xlu0 %v522, 64
    %v525 = vpop.permute.xlu0 %524
    %527 = vrot.lane.b32.xlu0 %v458, 96
    %v528 = vpop.permute.xlu0 %527
    %v531 = vsel %vm282, %v525, %v528
    %v532 = vsel %vm391, %v531, 0
    %534 = vmatprep.subr.bf16.mxu0 0
    %535 = vmatpush1.bf16.msra.mxu0 %v383
    %536 = vmatprep.subr.bf16.mxu0 0
    %537 = vmatpush1.bf16.msra.mxu0 %v384
    %538 = vmatprep.subr.bf16.mxu0 0
    %539 = vmatpush1.bf16.msra.mxu0 %v385
    %540 = vmatprep.subr.bf16.mxu0 0
    %541 = vmatpush1.bf16.msra.mxu0 %v386
    %542 = vmatprep.subr.bf16.mxu0 0
    %543 = vmatpush1.bf16.msra.mxu0 0
    %544 = vmatprep.subr.bf16.mxu0 0
    %545 = vmatpush1.bf16.msra.mxu0 0
    %546 = vmatprep.subr.bf16.mxu0 0
    %547 = vmatpush1.bf16.msra.mxu0 0
    %548 = vmatprep.subr.bf16.mxu0 0
    %549 = vmatpush1.bf16.msra.mxu0 0
    %550 = vmatprep.subr.bf16.mxu0 0
    %551 = vmatpush1.bf16.msra.mxu0 0
    %552 = vmatprep.subr.bf16.mxu0 0
    %553 = vmatpush1.bf16.msra.mxu0 0
    %554 = vmatprep.subr.bf16.mxu0 0
    %555 = vmatpush1.bf16.msra.mxu0 0
    %556 = vmatprep.subr.bf16.mxu0 0
    %557 = vmatpush1.bf16.msra.mxu0 0
    %558 = vmatprep.subr.bf16.mxu0 0
    %559 = vmatpush1.bf16.msra.mxu0 0
    %560 = vmatprep.subr.bf16.mxu0 0
    %561 = vmatpush1.bf16.msra.mxu0 0
    %562 = vmatprep.subr.bf16.mxu0 0
    %563 = vmatpush1.bf16.msra.mxu0 0
    %564 = vmatprep.subr.bf16.mxu0 0
    %565 = vmatpush1.bf16.msra.mxu0 0
    %566 = vmatprep.mubr.bf16.mxu0 0
    %567 = vmatmul.mubr.bf16.gmra.mrb[0].mxu0 %v532
    %v568 = vpop.f32.mrb[0].mxu0
    %v569 = vadd.f32 %v365, %v568
    %v570 = vpop.f32.mrb[0].mxu0
    %v571 = vpop.f32.mrb[0].mxu0
    %v572 = vpop.f32.mrb[0].mxu0
    %573 = vdwg.mxu0
    %v574 = vtanh.pop %v569
    %v575 = vadd.f32 %v574, 1.0
    %v576 = vmul.f32 %v575, 0.5
    %v577 = vmul.f32 %v576, %v451
    %579 = vrot.lane.b32.xlu0 %v574, 32
    %v580 = vpop.permute.xlu0 %579
    %v582 = vmul.f32 %v576, %v580
    %584 = vrot.lane.b32.xlu0 %v582, 32
    %v585 = vpop.permute.xlu0 %584
    %v587 = vadd.f32 %v577, %v585
    %v588 = vtanh.pop %v587
    %590 = vrot.lane.b32.xlu0 %v588, 32
    %v591 = vpop.permute.xlu0 %590
    %v593 = vmul.f32 %v576, %v591
    %v594 = vpack.c.bf16 %v593, %v593
    %v595 = vsel %vm282, %v525, 0
    %597 = vmatprep.subr.bf16.mxu0 0
    %598 = vmatpush1.bf16.msra.mxu0 %v278
    %599 = vmatprep.subr.bf16.mxu0 0
    %600 = vmatpush1.bf16.msra.mxu0 %v279
    %601 = vmatprep.subr.bf16.mxu0 0
    %602 = vmatpush1.bf16.msra.mxu0 0
    %603 = vmatprep.subr.bf16.mxu0 0
    %604 = vmatpush1.bf16.msra.mxu0 0
    %605 = vmatprep.subr.bf16.mxu0 0
    %606 = vmatpush1.bf16.msra.mxu0 0
    %607 = vmatprep.subr.bf16.mxu0 0
    %608 = vmatpush1.bf16.msra.mxu0 0
    %609 = vmatprep.subr.bf16.mxu0 0
    %610 = vmatpush1.bf16.msra.mxu0 0
    %611 = vmatprep.subr.bf16.mxu0 0
    %612 = vmatpush1.bf16.msra.mxu0 0
    %613 = vmatprep.subr.bf16.mxu0 0
    %614 = vmatpush1.bf16.msra.mxu0 0
    %615 = vmatprep.subr.bf16.mxu0 0
    %616 = vmatpush1.bf16.msra.mxu0 0
    %617 = vmatprep.subr.bf16.mxu0 0
    %618 = vmatpush1.bf16.msra.mxu0 0
    %619 = vmatprep.subr.bf16.mxu0 0
    %620 = vmatpush1.bf16.msra.mxu0 0
    %621 = vmatprep.subr.bf16.mxu0 0
    %622 = vmatpush1.bf16.msra.mxu0 0
    %623 = vmatprep.subr.bf16.mxu0 0
    %624 = vmatpush1.bf16.msra.mxu0 0
    %625 = vmatprep.subr.bf16.mxu0 0
    %626 = vmatpush1.bf16.msra.mxu0 0
    %627 = vmatprep.subr.bf16.mxu0 0
    %628 = vmatpush1.bf16.msra.mxu0 0
    %629 = vmatprep.mubr.bf16.mxu0 0
    %630 = vmatmul.mubr.bf16.gmra.mrb[0].mxu0 %v595
    %v631 = vpop.f32.mrb[0].mxu0
    %v632 = vadd.f32 0.0, %v631
    %v633 = vpop.f32.mrb[0].mxu0
    %v634 = vpop.f32.mrb[0].mxu0
    %v635 = vpop.f32.mrb[0].mxu0
    %636 = vdwg.mxu0
    %v637 = vadd.f32 %v227, %v632
    %v638 = vtanh.pop %v637
    %v639 = vadd.f32 %v638, 1.0
    %v640 = vmul.f32 %v639, 0.5
    %v641 = vmul.f32 %v640, %v515
    %643 = vrot.lane.b32.xlu0 %v638, 32
    %v644 = vpop.permute.xlu0 %643
    %v646 = vmul.f32 %v640, %v644
    %648 = vrot.lane.b32.xlu0 %v646, 32
    %v649 = vpop.permute.xlu0 %648
    %v651 = vadd.f32 %v641, %v649
    %v652 = vtanh.pop %v651
    %654 = vrot.lane.b32.xlu0 %v652, 32
    %v655 = vpop.permute.xlu0 %654
    %v657 = vmul.f32 %v640, %v655
    %v658 = vpack.c.bf16 %v657, %v657
    %660 = vrot.lane.b32.xlu0 %v658, 64
    %v661 = vpop.permute.xlu0 %660
    %663 = vrot.lane.b32.xlu0 %v594, 96
    %v664 = vpop.permute.xlu0 %663
    %v667 = vsel %vm282, %v661, %v664
    %v668 = vsel %vm391, %v667, 0
    %670 = vmatprep.subr.bf16.mxu0 0
    %671 = vmatpush1.bf16.msra.mxu0 %v383
    %672 = vmatprep.subr.bf16.mxu0 0
    %673 = vmatpush1.bf16.msra.mxu0 %v384
    %674 = vmatprep.subr.bf16.mxu0 0
    %675 = vmatpush1.bf16.msra.mxu0 %v385
    %676 = vmatprep.subr.bf16.mxu0 0
    %677 = vmatpush1.bf16.msra.mxu0 %v386
    %678 = vmatprep.subr.bf16.mxu0 0
    %679 = vmatpush1.bf16.msra.mxu0 0
    %680 = vmatprep.subr.bf16.mxu0 0
    %681 = vmatpush1.bf16.msra.mxu0 0
    %682 = vmatprep.subr.bf16.mxu0 0
    %683 = vmatpush1.bf16.msra.mxu0 0
    %684 = vmatprep.subr.bf16.mxu0 0
    %685 = vmatpush1.bf16.msra.mxu0 0
    %686 = vmatprep.subr.bf16.mxu0 0
    %687 = vmatpush1.bf16.msra.mxu0 0
    %688 = vmatprep.subr.bf16.mxu0 0
    %689 = vmatpush1.bf16.msra.mxu0 0
    %690 = vmatprep.subr.bf16.mxu0 0
    %691 = vmatpush1.bf16.msra.mxu0 0
    %692 = vmatprep.subr.bf16.mxu0 0
    %693 = vmatpush1.bf16.msra.mxu0 0
    %694 = vmatprep.subr.bf16.mxu0 0
    %695 = vmatpush1.bf16.msra.mxu0 0
    %696 = vmatprep.subr.bf16.mxu0 0
    %697 = vmatpush1.bf16.msra.mxu0 0
    %698 = vmatprep.subr.bf16.mxu0 0
    %699 = vmatpush1.bf16.msra.mxu0 0
    %700 = vmatprep.subr.bf16.mxu0 0
    %701 = vmatpush1.bf16.msra.mxu0 0
    %702 = vmatprep.mubr.bf16.mxu0 0
    %703 = vmatmul.mubr.bf16.gmra.mrb[0].mxu0 %v668
    %v704 = vpop.f32.mrb[0].mxu0
    %v705 = vadd.f32 %v365, %v704
    %v706 = vpop.f32.mrb[0].mxu0
    %v707 = vpop.f32.mrb[0].mxu0
    %v708 = vpop.f32.mrb[0].mxu0
    %709 = vdwg.mxu0
    %v710 = vtanh.pop %v705
    %v711 = vadd.f32 %v710, 1.0
    %v712 = vmul.f32 %v711, 0.5
    %v713 = vmul.f32 %v712, %v587
    %715 = vrot.lane.b32.xlu0 %v710, 32
    %v716 = vpop.permute.xlu0 %715
    %v718 = vmul.f32 %v712, %v716
    %720 = vrot.lane.b32.xlu0 %v718, 32
    %v721 = vpop.permute.xlu0 %720
    %v723 = vadd.f32 %v713, %v721
    %v724 = vtanh.pop %v723
    %726 = vrot.lane.b32.xlu0 %v724, 32
    %v727 = vpop.permute.xlu0 %726
    %v729 = vmul.f32 %v712, %v727
    %v730 = vpack.c.bf16 %v729, %v729
    %v731 = vsel %vm282, %v661, 0
    %733 = vmatprep.subr.bf16.mxu0 0
    %734 = vmatpush1.bf16.msra.mxu0 %v278
    %735 = vmatprep.subr.bf16.mxu0 0
    %736 = vmatpush1.bf16.msra.mxu0 %v279
    %737 = vmatprep.subr.bf16.mxu0 0
    %738 = vmatpush1.bf16.msra.mxu0 0
    %739 = vmatprep.subr.bf16.mxu0 0
    %740 = vmatpush1.bf16.msra.mxu0 0
    %741 = vmatprep.subr.bf16.mxu0 0
    %742 = vmatpush1.bf16.msra.mxu0 0
    %743 = vmatprep.subr.bf16.mxu0 0
    %744 = vmatpush1.bf16.msra.mxu0 0
    %745 = vmatprep.subr.bf16.mxu0 0
    %746 = vmatpush1.bf16.msra.mxu0 0
    %747 = vmatprep.subr.bf16.mxu0 0
    %748 = vmatpush1.bf16.msra.mxu0 0
    %749 = vmatprep.subr.bf16.mxu0 0
    %750 = vmatpush1.bf16.msra.mxu0 0
    %751 = vmatprep.subr.bf16.mxu0 0
    %752 = vmatpush1.bf16.msra.mxu0 0
    %753 = vmatprep.subr.bf16.mxu0 0
    %754 = vmatpush1.bf16.msra.mxu0 0
    %755 = vmatprep.subr.bf16.mxu0 0
    %756 = vmatpush1.bf16.msra.mxu0 0
    %757 = vmatprep.subr.bf16.mxu0 0
    %758 = vmatpush1.bf16.msra.mxu0 0
    %759 = vmatprep.subr.bf16.mxu0 0
    %760 = vmatpush1.bf16.msra.mxu0 0
    %761 = vmatprep.subr.bf16.mxu0 0
    %762 = vmatpush1.bf16.msra.mxu0 0
    %763 = vmatprep.subr.bf16.mxu0 0
    %764 = vmatpush1.bf16.msra.mxu0 0
    %765 = vmatprep.mubr.bf16.mxu0 0
    %766 = vmatmul.mubr.bf16.gmra.mrb[0].mxu0 %v731
    %v767 = vpop.f32.mrb[0].mxu0
    %v768 = vadd.f32 0.0, %v767
    %v769 = vpop.f32.mrb[0].mxu0
    %v770 = vpop.f32.mrb[0].mxu0
    %v771 = vpop.f32.mrb[0].mxu0
    %772 = vdwg.mxu0
    %v773 = vadd.f32 %v230, %v768
    %v774 = vtanh.pop %v773
    %v775 = vadd.f32 %v774, 1.0
    %v776 = vmul.f32 %v775, 0.5
    %v777 = vmul.f32 %v776, %v651
    %779 = vrot.lane.b32.xlu0 %v774, 32
    %v780 = vpop.permute.xlu0 %779
    %v782 = vmul.f32 %v776, %v780
    %784 = vrot.lane.b32.xlu0 %v782, 32
    %v785 = vpop.permute.xlu0 %784
    %v787 = vadd.f32 %v777, %v785
    %v788 = vtanh.pop %v787
    %790 = vrot.lane.b32.xlu0 %v788, 32
    %v791 = vpop.permute.xlu0 %790
    %v793 = vmul.f32 %v776, %v791
    %v794 = vpack.c.bf16 %v793, %v793
    %796 = vrot.lane.b32.xlu0 %v794, 64
    %v797 = vpop.permute.xlu0 %796
    %799 = vrot.lane.b32.xlu0 %v730, 96
    %v800 = vpop.permute.xlu0 %799
    %v803 = vsel %vm282, %v797, %v800
    %v804 = vsel %vm391, %v803, 0
    %806 = vmatprep.subr.bf16.mxu0 0
    %807 = vmatpush1.bf16.msra.mxu0 %v383
    %808 = vmatprep.subr.bf16.mxu0 0
    %809 = vmatpush1.bf16.msra.mxu0 %v384
    %810 = vmatprep.subr.bf16.mxu0 0
    %811 = vmatpush1.bf16.msra.mxu0 %v385
    %812 = vmatprep.subr.bf16.mxu0 0
    %813 = vmatpush1.bf16.msra.mxu0 %v386
    %814 = vmatprep.subr.bf16.mxu0 0
    %815 = vmatpush1.bf16.msra.mxu0 0
    %816 = vmatprep.subr.bf16.mxu0 0
    %817 = vmatpush1.bf16.msra.mxu0 0
    %818 = vmatprep.subr.bf16.mxu0 0
    %819 = vmatpush1.bf16.msra.mxu0 0
    %820 = vmatprep.subr.bf16.mxu0 0
    %821 = vmatpush1.bf16.msra.mxu0 0
    %822 = vmatprep.subr.bf16.mxu0 0
    %823 = vmatpush1.bf16.msra.mxu0 0
    %824 = vmatprep.subr.bf16.mxu0 0
    %825 = vmatpush1.bf16.msra.mxu0 0
    %826 = vmatprep.subr.bf16.mxu0 0
    %827 = vmatpush1.bf16.msra.mxu0 0
    %828 = vmatprep.subr.bf16.mxu0 0
    %829 = vmatpush1.bf16.msra.mxu0 0
    %830 = vmatprep.subr.bf16.mxu0 0
    %831 = vmatpush1.bf16.msra.mxu0 0
    %832 = vmatprep.subr.bf16.mxu0 0
    %833 = vmatpush1.bf16.msra.mxu0 0
    %834 = vmatprep.subr.bf16.mxu0 0
    %835 = vmatpush1.bf16.msra.mxu0 0
    %836 = vmatprep.subr.bf16.mxu0 0
    %837 = vmatpush1.bf16.msra.mxu0 0
    %838 = vmatprep.mubr.bf16.mxu0 0
    %839 = vmatmul.mubr.bf16.gmra.mrb[0].mxu0 %v804
    %v840 = vpop.f32.mrb[0].mxu0
    %v841 = vadd.f32 %v365, %v840
    %v842 = vpop.f32.mrb[0].mxu0
    %v843 = vpop.f32.mrb[0].mxu0
    %v844 = vpop.f32.mrb[0].mxu0
    %845 = vdwg.mxu0
    %v846 = vtanh.pop %v841
    %v847 = vadd.f32 %v846, 1.0
    %v848 = vmul.f32 %v847, 0.5
    %v849 = vmul.f32 %v848, %v723
    %851 = vrot.lane.b32.xlu0 %v846, 32
    %v852 = vpop.permute.xlu0 %851
    %v854 = vmul.f32 %v848, %v852
    %856 = vrot.lane.b32.xlu0 %v854, 32
    %v857 = vpop.permute.xlu0 %856
    %v859 = vadd.f32 %v849, %v857
    %v860 = vtanh.pop %v859
    %862 = vrot.lane.b32.xlu0 %v860, 32
    %v863 = vpop.permute.xlu0 %862
    %v865 = vmul.f32 %v848, %v863
    %v866 = vpack.c.bf16 %v865, %v865
    %v867 = vsel %vm282, %v797, 0
    %869 = vmatprep.subr.bf16.mxu0 0
    %870 = vmatpush1.bf16.msra.mxu0 %v278
    %871 = vmatprep.subr.bf16.mxu0 0
    %872 = vmatpush1.bf16.msra.mxu0 %v279
    %873 = vmatprep.subr.bf16.mxu0 0
    %874 = vmatpush1.bf16.msra.mxu0 0
    %875 = vmatprep.subr.bf16.mxu0 0
    %876 = vmatpush1.bf16.msra.mxu0 0
    %877 = vmatprep.subr.bf16.mxu0 0
    %878 = vmatpush1.bf16.msra.mxu0 0
    %879 = vmatprep.subr.bf16.mxu0 0
    %880 = vmatpush1.bf16.msra.mxu0 0
    %881 = vmatprep.subr.bf16.mxu0 0
    %882 = vmatpush1.bf16.msra.mxu0 0
    %883 = vmatprep.subr.bf16.mxu0 0
    %884 = vmatpush1.bf16.msra.mxu0 0
    %885 = vmatprep.subr.bf16.mxu0 0
    %886 = vmatpush1.bf16.msra.mxu0 0
    %887 = vmatprep.subr.bf16.mxu0 0
    %888 = vmatpush1.bf16.msra.mxu0 0
    %889 = vmatprep.subr.bf16.mxu0 0
    %890 = vmatpush1.bf16.msra.mxu0 0
    %891 = vmatprep.subr.bf16.mxu0 0
    %892 = vmatpush1.bf16.msra.mxu0 0
    %893 = vmatprep.subr.bf16.mxu0 0
    %894 = vmatpush1.bf16.msra.mxu0 0
    %895 = vmatprep.subr.bf16.mxu0 0
    %896 = vmatpush1.bf16.msra.mxu0 0
    %897 = vmatprep.subr.bf16.mxu0 0
    %898 = vmatpush1.bf16.msra.mxu0 0
    %899 = vmatprep.subr.bf16.mxu0 0
    %900 = vmatpush1.bf16.msra.mxu0 0
    %901 = vmatprep.mubr.bf16.mxu0 0
    %902 = vmatmul.mubr.bf16.gmra.mrb[0].mxu0 %v867
    %v903 = vpop.f32.mrb[0].mxu0
    %v904 = vadd.f32 0.0, %v903
    %v905 = vpop.f32.mrb[0].mxu0
    %v906 = vpop.f32.mrb[0].mxu0
    %v907 = vpop.f32.mrb[0].mxu0
    %908 = vdwg.mxu0
    %v909 = vadd.f32 %v235, %v904
    %v910 = vtanh.pop %v909
    %v911 = vadd.f32 %v910, 1.0
    %v912 = vmul.f32 %v911, 0.5
    %v913 = vmul.f32 %v912, %v787
    %915 = vrot.lane.b32.xlu0 %v910, 32
    %v916 = vpop.permute.xlu0 %915
    %v918 = vmul.f32 %v912, %v916
    %920 = vrot.lane.b32.xlu0 %v918, 32
    %v921 = vpop.permute.xlu0 %920
    %v923 = vadd.f32 %v913, %v921
    %v924 = vtanh.pop %v923
    %926 = vrot.lane.b32.xlu0 %v924, 32
    %v927 = vpop.permute.xlu0 %926
    %v929 = vmul.f32 %v912, %v927
    %v930 = vpack.c.bf16 %v929, %v929
    %932 = vrot.lane.b32.xlu0 %v930, 64
    %v933 = vpop.permute.xlu0 %932
    %935 = vrot.lane.b32.xlu0 %v866, 96
    %v936 = vpop.permute.xlu0 %935
    %v939 = vsel %vm282, %v933, %v936
    %v940 = vsel %vm391, %v939, 0
    %942 = vmatprep.subr.bf16.mxu0 0
    %943 = vmatpush1.bf16.msra.mxu0 %v383
    %944 = vmatprep.subr.bf16.mxu0 0
    %945 = vmatpush1.bf16.msra.mxu0 %v384
    %946 = vmatprep.subr.bf16.mxu0 0
    %947 = vmatpush1.bf16.msra.mxu0 %v385
    %948 = vmatprep.subr.bf16.mxu0 0
    %949 = vmatpush1.bf16.msra.mxu0 %v386
    %950 = vmatprep.subr.bf16.mxu0 0
    %951 = vmatpush1.bf16.msra.mxu0 0
    %952 = vmatprep.subr.bf16.mxu0 0
    %953 = vmatpush1.bf16.msra.mxu0 0
    %954 = vmatprep.subr.bf16.mxu0 0
    %955 = vmatpush1.bf16.msra.mxu0 0
    %956 = vmatprep.subr.bf16.mxu0 0
    %957 = vmatpush1.bf16.msra.mxu0 0
    %958 = vmatprep.subr.bf16.mxu0 0
    %959 = vmatpush1.bf16.msra.mxu0 0
    %960 = vmatprep.subr.bf16.mxu0 0
    %961 = vmatpush1.bf16.msra.mxu0 0
    %962 = vmatprep.subr.bf16.mxu0 0
    %963 = vmatpush1.bf16.msra.mxu0 0
    %964 = vmatprep.subr.bf16.mxu0 0
    %965 = vmatpush1.bf16.msra.mxu0 0
    %966 = vmatprep.subr.bf16.mxu0 0
    %967 = vmatpush1.bf16.msra.mxu0 0
    %968 = vmatprep.subr.bf16.mxu0 0
    %969 = vmatpush1.bf16.msra.mxu0 0
    %970 = vmatprep.subr.bf16.mxu0 0
    %971 = vmatpush1.bf16.msra.mxu0 0
    %972 = vmatprep.subr.bf16.mxu0 0
    %973 = vmatpush1.bf16.msra.mxu0 0
    %974 = vmatprep.mubr.bf16.mxu0 0
    %975 = vmatmul.mubr.bf16.gmra.mrb[0].mxu0 %v940
    %v976 = vpop.f32.mrb[0].mxu0
    %v977 = vadd.f32 %v365, %v976
    %v978 = vpop.f32.mrb[0].mxu0
    %v979 = vpop.f32.mrb[0].mxu0
    %v980 = vpop.f32.mrb[0].mxu0
    %981 = vdwg.mxu0
    %v982 = vtanh.pop %v977
    %v983 = vadd.f32 %v982, 1.0
    %v984 = vmul.f32 %v983, 0.5
    %v985 = vmul.f32 %v984, %v859
    %987 = vrot.lane.b32.xlu0 %v982, 32
    %v988 = vpop.permute.xlu0 %987
    %v990 = vmul.f32 %v984, %v988
    %992 = vrot.lane.b32.xlu0 %v990, 32
    %v993 = vpop.permute.xlu0 %992
    %v995 = vadd.f32 %v985, %v993
    %v996 = vtanh.pop %v995
    %998 = vrot.lane.b32.xlu0 %v996, 32
    %v999 = vpop.permute.xlu0 %998
    %v1001 = vmul.f32 %v984, %v999
    %v1002 = vpack.c.bf16 %v1001, %v1001
    %v1003 = vsel %vm282, %v933, 0
    %1005 = vmatprep.subr.bf16.mxu0 0
    %1006 = vmatpush1.bf16.msra.mxu0 %v278
    %1007 = vmatprep.subr.bf16.mxu0 0
    %1008 = vmatpush1.bf16.msra.mxu0 %v279
    %1009 = vmatprep.subr.bf16.mxu0 0
    %1010 = vmatpush1.bf16.msra.mxu0 0
    %1011 = vmatprep.subr.bf16.mxu0 0
    %1012 = vmatpush1.bf16.msra.mxu0 0
    %1013 = vmatprep.subr.bf16.mxu0 0
    %1014 = vmatpush1.bf16.msra.mxu0 0
    %1015 = vmatprep.subr.bf16.mxu0 0
    %1016 = vmatpush1.bf16.msra.mxu0 0
    %1017 = vmatprep.subr.bf16.mxu0 0
    %1018 = vmatpush1.bf16.msra.mxu0 0
    %1019 = vmatprep.subr.bf16.mxu0 0
    %1020 = vmatpush1.bf16.msra.mxu0 0
    %1021 = vmatprep.subr.bf16.mxu0 0
    %1022 = vmatpush1.bf16.msra.mxu0 0
    %1023 = vmatprep.subr.bf16.mxu0 0
    %1024 = vmatpush1.bf16.msra.mxu0 0
    %1025 = vmatprep.subr.bf16.mxu0 0
    %1026 = vmatpush1.bf16.msra.mxu0 0
    %1027 = vmatprep.subr.bf16.mxu0 0
    %1028 = vmatpush1.bf16.msra.mxu0 0
    %1029 = vmatprep.subr.bf16.mxu0 0
    %1030 = vmatpush1.bf16.msra.mxu0 0
    %1031 = vmatprep.subr.bf16.mxu0 0
    %1032 = vmatpush1.bf16.msra.mxu0 0
    %1033 = vmatprep.subr.bf16.mxu0 0
    %1034 = vmatpush1.bf16.msra.mxu0 0
    %1035 = vmatprep.subr.bf16.mxu0 0
    %1036 = vmatpush1.bf16.msra.mxu0 0
    %1037 = vmatprep.mubr.bf16.mxu0 0
    %1038 = vmatmul.mubr.bf16.gmra.mrb[0].mxu0 %v1003
    %v1039 = vpop.f32.mrb[0].mxu0
    %v1040 = vadd.f32 0.0, %v1039
    %v1041 = vpop.f32.mrb[0].mxu0
    %v1042 = vpop.f32.mrb[0].mxu0
    %v1043 = vpop.f32.mrb[0].mxu0
    %1044 = vdwg.mxu0
    %v1045 = vadd.f32 %v238, %v1040
    %v1046 = vtanh.pop %v1045
    %v1047 = vadd.f32 %v1046, 1.0
    %v1048 = vmul.f32 %v1047, 0.5
    %v1049 = vmul.f32 %v1048, %v923
    %1051 = vrot.lane.b32.xlu0 %v1046, 32
    %v1052 = vpop.permute.xlu0 %1051
    %v1054 = vmul.f32 %v1048, %v1052
    %1056 = vrot.lane.b32.xlu0 %v1054, 32
    %v1057 = vpop.permute.xlu0 %1056
    %v1059 = vadd.f32 %v1049, %v1057
    %v1060 = vtanh.pop %v1059
    %1062 = vrot.lane.b32.xlu0 %v1060, 32
    %v1063 = vpop.permute.xlu0 %1062
    %v1065 = vmul.f32 %v1048, %v1063
    %v1066 = vpack.c.bf16 %v1065, %v1065
    %1068 = vrot.lane.b32.xlu0 %v1066, 64
    %v1069 = vpop.permute.xlu0 %1068
    %1071 = vrot.lane.b32.xlu0 %v1002, 96
    %v1072 = vpop.permute.xlu0 %1071
    %v1075 = vsel %vm282, %v1069, %v1072
    %v1076 = vsel %vm391, %v1075, 0
    %1078 = vmatprep.subr.bf16.mxu0 0
    %1079 = vmatpush1.bf16.msra.mxu0 %v383
    %1080 = vmatprep.subr.bf16.mxu0 0
    %1081 = vmatpush1.bf16.msra.mxu0 %v384
    %1082 = vmatprep.subr.bf16.mxu0 0
    %1083 = vmatpush1.bf16.msra.mxu0 %v385
    %1084 = vmatprep.subr.bf16.mxu0 0
    %1085 = vmatpush1.bf16.msra.mxu0 %v386
    %1086 = vmatprep.subr.bf16.mxu0 0
    %1087 = vmatpush1.bf16.msra.mxu0 0
    %1088 = vmatprep.subr.bf16.mxu0 0
    %1089 = vmatpush1.bf16.msra.mxu0 0
    %1090 = vmatprep.subr.bf16.mxu0 0
    %1091 = vmatpush1.bf16.msra.mxu0 0
    %1092 = vmatprep.subr.bf16.mxu0 0
    %1093 = vmatpush1.bf16.msra.mxu0 0
    %1094 = vmatprep.subr.bf16.mxu0 0
    %1095 = vmatpush1.bf16.msra.mxu0 0
    %1096 = vmatprep.subr.bf16.mxu0 0
    %1097 = vmatpush1.bf16.msra.mxu0 0
    %1098 = vmatprep.subr.bf16.mxu0 0
    %1099 = vmatpush1.bf16.msra.mxu0 0
    %1100 = vmatprep.subr.bf16.mxu0 0
    %1101 = vmatpush1.bf16.msra.mxu0 0
    %1102 = vmatprep.subr.bf16.mxu0 0
    %1103 = vmatpush1.bf16.msra.mxu0 0
    %1104 = vmatprep.subr.bf16.mxu0 0
    %1105 = vmatpush1.bf16.msra.mxu0 0
    %1106 = vmatprep.subr.bf16.mxu0 0
    %1107 = vmatpush1.bf16.msra.mxu0 0
    %1108 = vmatprep.subr.bf16.mxu0 0
    %1109 = vmatpush1.bf16.msra.mxu0 0
    %1110 = vmatprep.mubr.bf16.mxu0 0
    %1111 = vmatmul.mubr.bf16.gmra.mrb[0].mxu0 %v1076
    %v1112 = vpop.f32.mrb[0].mxu0
    %v1113 = vadd.f32 %v365, %v1112
    %v1114 = vpop.f32.mrb[0].mxu0
    %v1115 = vpop.f32.mrb[0].mxu0
    %v1116 = vpop.f32.mrb[0].mxu0
    %1117 = vdwg.mxu0
    %v1118 = vtanh.pop %v1113
    %v1119 = vadd.f32 %v1118, 1.0
    %v1120 = vmul.f32 %v1119, 0.5
    %v1121 = vmul.f32 %v1120, %v995
    %1123 = vrot.lane.b32.xlu0 %v1118, 32
    %v1124 = vpop.permute.xlu0 %1123
    %v1126 = vmul.f32 %v1120, %v1124
    %1128 = vrot.lane.b32.xlu0 %v1126, 32
    %v1129 = vpop.permute.xlu0 %1128
    %v1131 = vadd.f32 %v1121, %v1129
    %v1132 = vtanh.pop %v1131
    %1134 = vrot.lane.b32.xlu0 %v1132, 32
    %v1135 = vpop.permute.xlu0 %1134
    %v1137 = vmul.f32 %v1120, %v1135
    %v1138 = vpack.c.bf16 %v1137, %v1137
    %v1139 = vsel %vm282, %v1069, 0
    %1141 = vmatprep.subr.bf16.mxu0 0
    %1142 = vmatpush1.bf16.msra.mxu0 %v278
    %1143 = vmatprep.subr.bf16.mxu0 0
    %1144 = vmatpush1.bf16.msra.mxu0 %v279
    %1145 = vmatprep.subr.bf16.mxu0 0
    %1146 = vmatpush1.bf16.msra.mxu0 0
    %1147 = vmatprep.subr.bf16.mxu0 0
    %1148 = vmatpush1.bf16.msra.mxu0 0
    %1149 = vmatprep.subr.bf16.mxu0 0
    %1150 = vmatpush1.bf16.msra.mxu0 0
    %1151 = vmatprep.subr.bf16.mxu0 0
    %1152 = vmatpush1.bf16.msra.mxu0 0
    %1153 = vmatprep.subr.bf16.mxu0 0
    %1154 = vmatpush1.bf16.msra.mxu0 0
    %1155 = vmatprep.subr.bf16.mxu0 0
    %1156 = vmatpush1.bf16.msra.mxu0 0
    %1157 = vmatprep.subr.bf16.mxu0 0
    %1158 = vmatpush1.bf16.msra.mxu0 0
    %1159 = vmatprep.subr.bf16.mxu0 0
    %1160 = vmatpush1.bf16.msra.mxu0 0
    %1161 = vmatprep.subr.bf16.mxu0 0
    %1162 = vmatpush1.bf16.msra.mxu0 0
    %1163 = vmatprep.subr.bf16.mxu0 0
    %1164 = vmatpush1.bf16.msra.mxu0 0
    %1165 = vmatprep.subr.bf16.mxu0 0
    %1166 = vmatpush1.bf16.msra.mxu0 0
    %1167 = vmatprep.subr.bf16.mxu0 0
    %1168 = vmatpush1.bf16.msra.mxu0 0
    %1169 = vmatprep.subr.bf16.mxu0 0
    %1170 = vmatpush1.bf16.msra.mxu0 0
    %1171 = vmatprep.subr.bf16.mxu0 0
    %1172 = vmatpush1.bf16.msra.mxu0 0
    %1173 = vmatprep.mubr.bf16.mxu0 0
    %1174 = vmatmul.mubr.bf16.gmra.mrb[0].mxu0 %v1139
    %v1175 = vpop.f32.mrb[0].mxu0
    %v1176 = vadd.f32 0.0, %v1175
    %v1177 = vpop.f32.mrb[0].mxu0
    %v1178 = vpop.f32.mrb[0].mxu0
    %v1179 = vpop.f32.mrb[0].mxu0
    %1180 = vdwg.mxu0
    %v1181 = vadd.f32 %v243, %v1176
    %v1182 = vtanh.pop %v1181
    %v1183 = vadd.f32 %v1182, 1.0
    %v1184 = vmul.f32 %v1183, 0.5
    %v1185 = vmul.f32 %v1184, %v1059
    %1187 = vrot.lane.b32.xlu0 %v1182, 32
    %v1188 = vpop.permute.xlu0 %1187
    %v1190 = vmul.f32 %v1184, %v1188
    %1192 = vrot.lane.b32.xlu0 %v1190, 32
    %v1193 = vpop.permute.xlu0 %1192
    %v1195 = vadd.f32 %v1185, %v1193
    %v1196 = vtanh.pop %v1195
    %1198 = vrot.lane.b32.xlu0 %v1196, 32
    %v1199 = vpop.permute.xlu0 %1198
    %v1201 = vmul.f32 %v1184, %v1199
    %v1202 = vpack.c.bf16 %v1201, %v1201
    %1204 = vrot.lane.b32.xlu0 %v1202, 64
    %v1205 = vpop.permute.xlu0 %1204
    %1207 = vrot.lane.b32.xlu0 %v1138, 96
    %v1208 = vpop.permute.xlu0 %1207
    %v1211 = vsel %vm282, %v1205, %v1208
    %v1212 = vsel %vm391, %v1211, 0
    %1214 = vmatprep.subr.bf16.mxu0 0
    %1215 = vmatpush1.bf16.msra.mxu0 %v383
    %1216 = vmatprep.subr.bf16.mxu0 0
    %1217 = vmatpush1.bf16.msra.mxu0 %v384
    %1218 = vmatprep.subr.bf16.mxu0 0
    %1219 = vmatpush1.bf16.msra.mxu0 %v385
    %1220 = vmatprep.subr.bf16.mxu0 0
    %1221 = vmatpush1.bf16.msra.mxu0 %v386
    %1222 = vmatprep.subr.bf16.mxu0 0
    %1223 = vmatpush1.bf16.msra.mxu0 0
    %1224 = vmatprep.subr.bf16.mxu0 0
    %1225 = vmatpush1.bf16.msra.mxu0 0
    %1226 = vmatprep.subr.bf16.mxu0 0
    %1227 = vmatpush1.bf16.msra.mxu0 0
    %1228 = vmatprep.subr.bf16.mxu0 0
    %1229 = vmatpush1.bf16.msra.mxu0 0
    %1230 = vmatprep.subr.bf16.mxu0 0
    %1231 = vmatpush1.bf16.msra.mxu0 0
    %1232 = vmatprep.subr.bf16.mxu0 0
    %1233 = vmatpush1.bf16.msra.mxu0 0
    %1234 = vmatprep.subr.bf16.mxu0 0
    %1235 = vmatpush1.bf16.msra.mxu0 0
    %1236 = vmatprep.subr.bf16.mxu0 0
    %1237 = vmatpush1.bf16.msra.mxu0 0
    %1238 = vmatprep.subr.bf16.mxu0 0
    %1239 = vmatpush1.bf16.msra.mxu0 0
    %1240 = vmatprep.subr.bf16.mxu0 0
    %1241 = vmatpush1.bf16.msra.mxu0 0
    %1242 = vmatprep.subr.bf16.mxu0 0
    %1243 = vmatpush1.bf16.msra.mxu0 0
    %1244 = vmatprep.subr.bf16.mxu0 0
    %1245 = vmatpush1.bf16.msra.mxu0 0
    %1246 = vmatprep.mubr.bf16.mxu0 0
    %1247 = vmatmul.mubr.bf16.gmra.mrb[0].mxu0 %v1212
    %v1248 = vpop.f32.mrb[0].mxu0
    %v1249 = vadd.f32 %v365, %v1248
    %v1250 = vpop.f32.mrb[0].mxu0
    %v1251 = vpop.f32.mrb[0].mxu0
    %v1252 = vpop.f32.mrb[0].mxu0
    %1253 = vdwg.mxu0
    %v1254 = vtanh.pop %v1249
    %v1255 = vadd.f32 %v1254, 1.0
    %v1256 = vmul.f32 %v1255, 0.5
    %v1257 = vmul.f32 %v1256, %v1131
    %1259 = vrot.lane.b32.xlu0 %v1254, 32
    %v1260 = vpop.permute.xlu0 %1259
    %v1262 = vmul.f32 %v1256, %v1260
    %1264 = vrot.lane.b32.xlu0 %v1262, 32
    %v1265 = vpop.permute.xlu0 %1264
    %v1267 = vadd.f32 %v1257, %v1265
    %v1268 = vtanh.pop %v1267
    %1270 = vrot.lane.b32.xlu0 %v1268, 32
    %v1271 = vpop.permute.xlu0 %1270
    %v1273 = vmul.f32 %v1256, %v1271
    %v1274 = vpack.c.bf16 %v1273, %v1273
    %v1275 = vsel %vm282, %v1205, 0
    %1277 = vmatprep.subr.bf16.mxu0 0
    %1278 = vmatpush1.bf16.msra.mxu0 %v278
    %1279 = vmatprep.subr.bf16.mxu0 0
    %1280 = vmatpush1.bf16.msra.mxu0 %v279
    %1281 = vmatprep.subr.bf16.mxu0 0
    %1282 = vmatpush1.bf16.msra.mxu0 0
    %1283 = vmatprep.subr.bf16.mxu0 0
    %1284 = vmatpush1.bf16.msra.mxu0 0
    %1285 = vmatprep.subr.bf16.mxu0 0
    %1286 = vmatpush1.bf16.msra.mxu0 0
    %1287 = vmatprep.subr.bf16.mxu0 0
    %1288 = vmatpush1.bf16.msra.mxu0 0
    %1289 = vmatprep.subr.bf16.mxu0 0
    %1290 = vmatpush1.bf16.msra.mxu0 0
    %1291 = vmatprep.subr.bf16.mxu0 0
    %1292 = vmatpush1.bf16.msra.mxu0 0
    %1293 = vmatprep.subr.bf16.mxu0 0
    %1294 = vmatpush1.bf16.msra.mxu0 0
    %1295 = vmatprep.subr.bf16.mxu0 0
    %1296 = vmatpush1.bf16.msra.mxu0 0
    %1297 = vmatprep.subr.bf16.mxu0 0
    %1298 = vmatpush1.bf16.msra.mxu0 0
    %1299 = vmatprep.subr.bf16.mxu0 0
    %1300 = vmatpush1.bf16.msra.mxu0 0
    %1301 = vmatprep.subr.bf16.mxu0 0
    %1302 = vmatpush1.bf16.msra.mxu0 0
    %1303 = vmatprep.subr.bf16.mxu0 0
    %1304 = vmatpush1.bf16.msra.mxu0 0
    %1305 = vmatprep.subr.bf16.mxu0 0
    %1306 = vmatpush1.bf16.msra.mxu0 0
    %1307 = vmatprep.subr.bf16.mxu0 0
    %1308 = vmatpush1.bf16.msra.mxu0 0
    %1309 = vmatprep.mubr.bf16.mxu0 0
    %1310 = vmatmul.mubr.bf16.gmra.mrb[0].mxu0 %v1275
    %v1311 = vpop.f32.mrb[0].mxu0
    %v1312 = vadd.f32 0.0, %v1311
    %v1313 = vpop.f32.mrb[0].mxu0
    %v1314 = vpop.f32.mrb[0].mxu0
    %v1315 = vpop.f32.mrb[0].mxu0
    %1316 = vdwg.mxu0
    %v1317 = vadd.f32 %v246, %v1312
    %v1318 = vtanh.pop %v1317
    %v1319 = vadd.f32 %v1318, 1.0
    %v1320 = vmul.f32 %v1319, 0.5
    %v1321 = vmul.f32 %v1320, %v1195
    %1323 = vrot.lane.b32.xlu0 %v1318, 32
    %v1324 = vpop.permute.xlu0 %1323
    %v1326 = vmul.f32 %v1320, %v1324
    %1328 = vrot.lane.b32.xlu0 %v1326, 32
    %v1329 = vpop.permute.xlu0 %1328
    %v1331 = vadd.f32 %v1321, %v1329
    %v1332 = vtanh.pop %v1331
    %1334 = vrot.lane.b32.xlu0 %v1332, 32
    %v1335 = vpop.permute.xlu0 %1334
    %v1337 = vmul.f32 %v1320, %v1335
    %v1338 = vpack.c.bf16 %v1337, %v1337
    %1340 = vrot.lane.b32.xlu0 %v1338, 64
    %v1341 = vpop.permute.xlu0 %1340
    %1343 = vrot.lane.b32.xlu0 %v1274, 96
    %v1344 = vpop.permute.xlu0 %1343
    %v1347 = vsel %vm282, %v1341, %v1344
    %v1348 = vsel %vm391, %v1347, 0
    %1350 = vmatprep.subr.bf16.mxu0 0
    %1351 = vmatpush1.bf16.msra.mxu0 %v383
    %1352 = vmatprep.subr.bf16.mxu0 0
    %1353 = vmatpush1.bf16.msra.mxu0 %v384
    %1354 = vmatprep.subr.bf16.mxu0 0
    %1355 = vmatpush1.bf16.msra.mxu0 %v385
    %1356 = vmatprep.subr.bf16.mxu0 0
    %1357 = vmatpush1.bf16.msra.mxu0 %v386
    %1358 = vmatprep.subr.bf16.mxu0 0
    %1359 = vmatpush1.bf16.msra.mxu0 0
    %1360 = vmatprep.subr.bf16.mxu0 0
    %1361 = vmatpush1.bf16.msra.mxu0 0
    %1362 = vmatprep.subr.bf16.mxu0 0
    %1363 = vmatpush1.bf16.msra.mxu0 0
    %1364 = vmatprep.subr.bf16.mxu0 0
    %1365 = vmatpush1.bf16.msra.mxu0 0
    %1366 = vmatprep.subr.bf16.mxu0 0
    %1367 = vmatpush1.bf16.msra.mxu0 0
    %1368 = vmatprep.subr.bf16.mxu0 0
    %1369 = vmatpush1.bf16.msra.mxu0 0
    %1370 = vmatprep.subr.bf16.mxu0 0
    %1371 = vmatpush1.bf16.msra.mxu0 0
    %1372 = vmatprep.subr.bf16.mxu0 0
    %1373 = vmatpush1.bf16.msra.mxu0 0
    %1374 = vmatprep.subr.bf16.mxu0 0
    %1375 = vmatpush1.bf16.msra.mxu0 0
    %1376 = vmatprep.subr.bf16.mxu0 0
    %1377 = vmatpush1.bf16.msra.mxu0 0
    %1378 = vmatprep.subr.bf16.mxu0 0
    %1379 = vmatpush1.bf16.msra.mxu0 0
    %1380 = vmatprep.subr.bf16.mxu0 0
    %1381 = vmatpush1.bf16.msra.mxu0 0
    %1382 = vmatprep.mubr.bf16.mxu0 0
    %1383 = vmatmul.mubr.bf16.gmra.mrb[0].mxu0 %v1348
    %v1384 = vpop.f32.mrb[0].mxu0
    %v1385 = vadd.f32 %v365, %v1384
    %v1386 = vpop.f32.mrb[0].mxu0
    %v1387 = vpop.f32.mrb[0].mxu0
    %v1388 = vpop.f32.mrb[0].mxu0
    %1389 = vdwg.mxu0
    %v1390 = vtanh.pop %v1385
    %v1391 = vadd.f32 %v1390, 1.0
    %v1392 = vmul.f32 %v1391, 0.5
    %v1393 = vmul.f32 %v1392, %v1267
    %1395 = vrot.lane.b32.xlu0 %v1390, 32
    %v1396 = vpop.permute.xlu0 %1395
    %v1398 = vmul.f32 %v1392, %v1396
    %1400 = vrot.lane.b32.xlu0 %v1398, 32
    %v1401 = vpop.permute.xlu0 %1400
    %v1403 = vadd.f32 %v1393, %v1401
    %v1404 = vtanh.pop %v1403
    %1406 = vrot.lane.b32.xlu0 %v1404, 32
    %v1407 = vpop.permute.xlu0 %1406
    %v1409 = vmul.f32 %v1392, %v1407
    %v1410 = vpack.c.bf16 %v1409, %v1409
    %v1411 = vld [vmem:[%s9] sm:$0xf]
    %v1412 = vld [vmem:[%s9 + $0x4] sm:$0xf]
    %v1413 = vld [vmem:[%s9 + $0x8] sm:$0xf]
    %v1414 = vld [vmem:[%s9 + $0xc] sm:$0xf]
    %1416 = vrot.lane.b32.xlu0 %v1410, 64
    %v1417 = vpop.permute.xlu0 %1416
    %v1422 = vunpack.c.l.b16 %v1411
    %v1423 = vunpack.c.l.b16 %v1412
    %v1424 = vunpack.c.l.b16 %v1413
    %v1425 = vunpack.c.l.b16 %v1414
    %v1426 = vpack.c.b16 %v1423, %v1422
    %v1427 = vpack.c.b16 %v1425, %v1424
    %v1431 = vsel %vm282, %v1417, 0
    %1433 = vmatprep.subr.bf16.mxu0 0
    %1434 = vmatpush1.bf16.msra.mxu0 %v1426
    %1435 = vmatprep.subr.bf16.mxu0 0
    %1436 = vmatpush1.bf16.msra.mxu0 %v1427
    %1437 = vmatprep.subr.bf16.mxu0 0
    %1438 = vmatpush1.bf16.msra.mxu0 0
    %1439 = vmatprep.subr.bf16.mxu0 0
    %1440 = vmatpush1.bf16.msra.mxu0 0
    %1441 = vmatprep.subr.bf16.mxu0 0
    %1442 = vmatpush1.bf16.msra.mxu0 0
    %1443 = vmatprep.subr.bf16.mxu0 0
    %1444 = vmatpush1.bf16.msra.mxu0 0
    %1445 = vmatprep.subr.bf16.mxu0 0
    %1446 = vmatpush1.bf16.msra.mxu0 0
    %1447 = vmatprep.subr.bf16.mxu0 0
    %1448 = vmatpush1.bf16.msra.mxu0 0
    %1449 = vmatprep.subr.bf16.mxu0 0
    %1450 = vmatpush1.bf16.msra.mxu0 0
    %1451 = vmatprep.subr.bf16.mxu0 0
    %1452 = vmatpush1.bf16.msra.mxu0 0
    %1453 = vmatprep.subr.bf16.mxu0 0
    %1454 = vmatpush1.bf16.msra.mxu0 0
    %1455 = vmatprep.subr.bf16.mxu0 0
    %1456 = vmatpush1.bf16.msra.mxu0 0
    %1457 = vmatprep.subr.bf16.mxu0 0
    %1458 = vmatpush1.bf16.msra.mxu0 0
    %1459 = vmatprep.subr.bf16.mxu0 0
    %1460 = vmatpush1.bf16.msra.mxu0 0
    %1461 = vmatprep.subr.bf16.mxu0 0
    %1462 = vmatpush1.bf16.msra.mxu0 0
    %1463 = vmatprep.subr.bf16.mxu0 0
    %1464 = vmatpush1.bf16.msra.mxu0 0
    %1465 = vmatprep.mubr.bf16.mxu0 0
    %1466 = vmatmul.mubr.bf16.gmra.mrb[0].mxu0 %v1431
    %v1467 = vpop.f32.mrb[0].mxu0
    %v1468 = vadd.f32 %v126, %v1467
    %v1469 = vpop.f32.mrb[0].mxu0
    %v1470 = vpop.f32.mrb[0].mxu0
    %v1471 = vpop.f32.mrb[0].mxu0
    %1472 = vdwg.mxu0
    %v1473 = vmax.f32 %v1468, 0.0
    %v1474 = vpack.c.bf16 %v1473, %v1473
    %v1475 = vld [vmem:[%s12] sm:$0xf]
    %v1476 = vld [vmem:[%s12 + $0x4] sm:$0xf]
    %v1477 = vld [vmem:[%s12 + $0x8] sm:$0xf]
    %v1478 = vld [vmem:[%s12 + $0xc] sm:$0xf]
    %v1479 = vld [vmem:[%s13] sm:$0x1]
    %v1481 = vlaneseq
    %v1482 = vshrl.u32 %v1481, 7
    %v1483 = vsub.s32 0, %v1482
    %v1484 = vrot.slane %v1479, %v1483
    %v1490 = vunpack.c.l.b16 %v1475
    %v1491 = vunpack.c.l.b16 %v1476
    %v1492 = vunpack.c.l.b16 %v1477
    %v1493 = vunpack.c.l.b16 %v1478
    %v1494 = vpack.c.b16 %v1491, %v1490
    %v1495 = vpack.c.b16 %v1493, %v1492
    %v1499 = vsel %vm282, %v1474, 0
    %1501 = vmatprep.subr.bf16.mxu0 0
    %1502 = vmatpush1.bf16.msra.mxu0 %v1494
    %1503 = vmatprep.subr.bf16.mxu0 0
    %1504 = vmatpush1.bf16.msra.mxu0 %v1495
    %1505 = vmatprep.subr.bf16.mxu0 0
    %1506 = vmatpush1.bf16.msra.mxu0 0
    %1507 = vmatprep.subr.bf16.mxu0 0
    %1508 = vmatpush1.bf16.msra.mxu0 0
    %1509 = vmatprep.subr.bf16.mxu0 0
    %1510 = vmatpush1.bf16.msra.mxu0 0
    %1511 = vmatprep.subr.bf16.mxu0 0
    %1512 = vmatpush1.bf16.msra.mxu0 0
    %1513 = vmatprep.subr.bf16.mxu0 0
    %1514 = vmatpush1.bf16.msra.mxu0 0
    %1515 = vmatprep.subr.bf16.mxu0 0
    %1516 = vmatpush1.bf16.msra.mxu0 0
    %1517 = vmatprep.subr.bf16.mxu0 0
    %1518 = vmatpush1.bf16.msra.mxu0 0
    %1519 = vmatprep.subr.bf16.mxu0 0
    %1520 = vmatpush1.bf16.msra.mxu0 0
    %1521 = vmatprep.subr.bf16.mxu0 0
    %1522 = vmatpush1.bf16.msra.mxu0 0
    %1523 = vmatprep.subr.bf16.mxu0 0
    %1524 = vmatpush1.bf16.msra.mxu0 0
    %1525 = vmatprep.subr.bf16.mxu0 0
    %1526 = vmatpush1.bf16.msra.mxu0 0
    %1527 = vmatprep.subr.bf16.mxu0 0
    %1528 = vmatpush1.bf16.msra.mxu0 0
    %1529 = vmatprep.subr.bf16.mxu0 0
    %1530 = vmatpush1.bf16.msra.mxu0 0
    %1531 = vmatprep.subr.bf16.mxu0 0
    %1532 = vmatpush1.bf16.msra.mxu0 0
    %1533 = vmatprep.mubr.bf16.mxu0 0
    %1534 = vmatmul.mubr.bf16.gmra.mrb[0].mxu0 %v1499
    %v1535 = vpop.f32.mrb[0].mxu0
    %v1536 = vadd.f32 %v1484, %v1535
    %v1537 = vpop.f32.mrb[0].mxu0
    %v1538 = vpop.f32.mrb[0].mxu0
    %v1539 = vpop.f32.mrb[0].mxu0
    %1540 = vdwg.mxu0
    %vm1541 = vcmask 15360
    %1542 = vst.msk [vmem:[%s14] sm:$0xff] %vm1541, %v1536
    // Predicated region
    $region66: #{tpu_custom_call.1} parent=1 // pred_check
      _
    $region67: #{tpu_custom_call.1} parent=1 // pred_check_branch
      %1544 = sbr.rel (0) target = $region69
    $region68: #{tpu_custom_call.1} parent=1 // pred_region
      _
    $region69: #{tpu_custom_call.1} parent=1 // pred_fallthru
      _
    // Predicated region
    $region70: #{tpu_custom_call.1} parent=1 // pred_check
      _
    $region71: #{tpu_custom_call.1} parent=1 // pred_check_branch
      %1546 = sbr.rel (0) target = $region73
    $region72: #{tpu_custom_call.1} parent=1 // pred_region
      _
    $region73: #{tpu_custom_call.1} parent=1 // pred_fallthru
      _
    %1547 = vsyncpa [#allocation3], 1
    %1548 = vsyncpa [#allocation5], 1

</llo_original>
